<compile_context>
chip_gen: v7x
topology: tpu7x:2x2x1
jax: 0.10.0
libtpu: 0.0.40
codegen_flags: <defaults>
</compile_context>

<pallas_src>
import functools

import jax
import jax.numpy as jnp
from jax import lax
from jax.experimental import pallas as pl
from jax.experimental.pallas import tpu as pltpu

EPS = 1e-5                                  # PyTorch BatchNorm2d default eps
_VMEM_LIMIT = 32 * 1024 * 1024              # safe on v5e/v6e/v7x (64 MiB phys on v7x)


# ----------------------------------------------------------------------------
# Pass 1: conv3x3 (SAME) via banded-weight matmuls + conv bias + BN statistics.
# ----------------------------------------------------------------------------
def _conv_stats_kernel(xpad_ref, w_ref, b_ref, y_ref, sum_ref, ssq_ref):
    # xpad_ref: (1, H+2, (W+2)*Cin) f32   one SAME-padded image (in-kernel im2col)
    # w_ref:    (3, (W+2)*Cin, W*Cout) bf16  block-banded weights, one per dy
    # b_ref:    (1, W*Cout) f32              conv bias tiled over W
    # y_ref:    (1, H, W*Cout) f32           pre-BN conv output
    # sum_ref/ssq_ref: (1, W*Cout) f32       accumulated across the N grid axis
    n = pl.program_id(0)
    H = y_ref.shape[1]
    WC = y_ref.shape[2]

    acc = jnp.zeros((H, WC), jnp.float32)
    for dy in range(3):                      # 3 lane-dense MXU matmuls (K=(W+2)*Cin)
        lhs = xpad_ref[0, dy:dy + H, :].astype(jnp.bfloat16)
        acc = acc + jnp.dot(lhs, w_ref[dy], preferred_element_type=jnp.float32)
    y = acc + b_ref[...]                     # conv bias

    @pl.when(n == 0)                         # init resident stat accumulators
    def _():
        sum_ref[...] = jnp.zeros_like(sum_ref)
        ssq_ref[...] = jnp.zeros_like(ssq_ref)

    sum_ref[...] = sum_ref[...] + jnp.sum(y, axis=0, keepdims=True)
    ssq_ref[...] = ssq_ref[...] + jnp.sum(y * y, axis=0, keepdims=True)
    y_ref[0, :, :] = y


def _conv_pass(xpad2d, wband_bf16, bias_row, H, WC_out):
    N = xpad2d.shape[0]
    y, s, ss = pl.pallas_call(
        _conv_stats_kernel,
        grid=(N,),
        in_specs=[
            pl.BlockSpec((1, xpad2d.shape[1], xpad2d.shape[2]),
                         lambda n: (n, 0, 0)),
            pl.BlockSpec(wband_bf16.shape, lambda n: (0, 0, 0)),   # VMEM-resident
            pl.BlockSpec((1, WC_out), lambda n: (0, 0)),           # VMEM-resident
        ],
        out_specs=[
            pl.BlockSpec((1, H, WC_out), lambda n: (n, 0, 0)),
            pl.BlockSpec((1, WC_out), lambda n: (0, 0)),           # accumulator
            pl.BlockSpec((1, WC_out), lambda n: (0, 0)),           # accumulator
        ],
        out_shape=[
            jax.ShapeDtypeStruct((N, H, WC_out), jnp.float32),
            jax.ShapeDtypeStruct((1, WC_out), jnp.float32),
            jax.ShapeDtypeStruct((1, WC_out), jnp.float32),
        ],
        compiler_params=pltpu.CompilerParams(
            dimension_semantics=("arbitrary",),  # stats carried across the grid
            vmem_limit_bytes=_VMEM_LIMIT),
    )(xpad2d, wband_bf16, bias_row)
    return y, s, ss


# ----------------------------------------------------------------------------
# Pass 2: BatchNorm affine (global stats) + optional residual + ReLU, tiled.
# ----------------------------------------------------------------------------
def _bn_relu_kernel(y_ref, scale_ref, shift_ref, o_ref):
    o_ref[...] = jnp.maximum(y_ref[...] * scale_ref[...] + shift_ref[...], 0.0)


def _bn_res_relu_kernel(y_ref, scale_ref, shift_ref, res_ref, o_ref):
    o_ref[...] = jnp.maximum(
        y_ref[...] * scale_ref[...] + shift_ref[...] + res_ref[...], 0.0)


def _row_tile(rows, cap=512):
    """Largest row-tile that divides `rows`, is a multiple of 8, and <= cap."""
    if rows <= cap:
        return rows
    for t in range(cap - cap % 8, 7, -8):
        if rows % t == 0:
            return t
    return rows


def _bn_pass(y3d, scale_row, shift_row, residual_rows=None):
    N, H, WC = y3d.shape
    rows = N * H
    y2d = y3d.reshape(rows, WC)
    tm = _row_tile(rows)
    row_spec = pl.BlockSpec((tm, WC), lambda i: (i, 0))
    vec_spec = pl.BlockSpec((1, WC), lambda i: (0, 0))
    if residual_rows is None:                      # no dummy residual DMA
        kernel = _bn_relu_kernel
        ins = (y2d, scale_row, shift_row)
        in_specs = [row_spec, vec_spec, vec_spec]
    else:
        kernel = _bn_res_relu_kernel
        ins = (y2d, scale_row, shift_row, residual_rows)
        in_specs = [row_spec, vec_spec, vec_spec, row_spec]
    return pl.pallas_call(
        kernel,
        grid=(rows // tm,),
        in_specs=in_specs,
        out_specs=row_spec,
        out_shape=jax.ShapeDtypeStruct((rows, WC), jnp.float32),
        compiler_params=pltpu.CompilerParams(
            dimension_semantics=("parallel",),     # independent row tiles (megacore)
            vmem_limit_bytes=_VMEM_LIMIT),
    )(*ins)


# ----------------------------------------------------------------------------
# Layer wrapper: conv3x3 -> BN (training-mode batch stats) -> (+res) -> ReLU.
# ----------------------------------------------------------------------------
def _banded_weights(w_hwio, W):
    """(3,3,Cin,Cout) -> (3, (W+2)*Cin, W*Cout) block-banded matrices so the
    3x3 SAME conv becomes 3 lane-dense matmuls (one per vertical tap dy)."""
    Cin, Cout = w_hwio.shape[2], w_hwio.shape[3]
    eye = jnp.eye(W, dtype=w_hwio.dtype)
    bands = []
    for dy in range(3):
        b = jnp.zeros(((W + 2) * Cin, W * Cout), w_hwio.dtype)
        for dx in range(3):
            blk = jnp.kron(eye, w_hwio[dy, dx])              # (W*Cin, W*Cout)
            b = b + jnp.pad(blk, ((dx * Cin, (2 - dx) * Cin), (0, 0)))
        bands.append(b)
    return jnp.stack(bands, axis=0)


def _conv_bn_relu_block(x_rows, N, H, W, Cin, Cout, wband_bf16,
                        bias, gamma, beta, residual_rows=None):
    """x_rows: (N*H, W*Cin) f32 activation -> (N*H, W*Cout) f32 activation."""
    xpad = jnp.pad(x_rows.reshape(N, H, W, Cin), ((0, 0), (1, 1), (1, 1), (0, 0)))
    xpad2d = xpad.reshape(N, H + 2, (W + 2) * Cin)           # single padded copy
    bias_row = jnp.tile(bias, W).reshape(1, W * Cout).astype(jnp.float32)

    y3d, s_row, ss_row = _conv_pass(xpad2d, wband_bf16, bias_row, H, W * Cout)

    # Global BatchNorm statistics (biased variance, training-mode forward).
    m = float(N * H * W)
    s = jnp.sum(s_row.reshape(W, Cout), axis=0)
    ss = jnp.sum(ss_row.reshape(W, Cout), axis=0)
    mean = s / m
    var = jnp.maximum(ss / m - mean * mean, 0.0)
    scale = gamma * lax.rsqrt(var + EPS)
    shift = beta - mean * scale
    scale_row = jnp.tile(scale, W).reshape(1, W * Cout)
    shift_row = jnp.tile(shift, W).reshape(1, W * Cout)

    return _bn_pass(y3d, scale_row, shift_row, residual_rows)


# ----------------------------------------------------------------------------
# Parameter init (deterministic, PyTorch-equivalent shapes) + forward pass.
# ----------------------------------------------------------------------------
def init_params(key, in_channels, num_filters):
    k_in_w, k_in_b, k_res_w, k_res_b = jax.random.split(key, 4)
    w_in = 0.1 * jax.random.normal(k_in_w, (num_filters, in_channels, 3, 3), jnp.float32)
    b_in = 0.1 * jax.random.normal(k_in_b, (num_filters,), jnp.float32)
    w_res = 0.1 * jax.random.normal(k_res_w, (num_filters, num_filters, 3, 3), jnp.float32)
    b_res = 0.1 * jax.random.normal(k_res_b, (num_filters,), jnp.float32)
    hwio = lambda w: jnp.transpose(w, (2, 3, 1, 0))          # OIHW -> HWIO
    return {
        "w_in": hwio(w_in), "b_in": b_in,
        "g_in": jnp.ones((num_filters,), jnp.float32),       # BN weight default
        "be_in": jnp.zeros((num_filters,), jnp.float32),     # BN bias default
        "w_res": hwio(w_res), "b_res": b_res,
        "g_res": jnp.ones((num_filters,), jnp.float32),
        "be_res": jnp.zeros((num_filters,), jnp.float32),
    }


def resnet_encoder_forward(x_nchw, params, num_blocks):
    N, Cin, H, W = x_nchw.shape
    Cout = params["b_in"].shape[0]
    band_in = _banded_weights(params["w_in"], W).astype(jnp.bfloat16)
    band_res = _banded_weights(params["w_res"], W).astype(jnp.bfloat16)

    x_rows = jnp.transpose(x_nchw, (0, 2, 3, 1)).reshape(N * H, W * Cin)
    a = _conv_bn_relu_block(x_rows, N, H, W, Cin, Cout, band_in,
                            params["b_in"], params["g_in"], params["be_in"])
    # res_tower: ONE shared ResBlock applied num_blocks times (weight sharing).
    # TODO(synk): optionally fuse the whole tower into one pallas_call with
    # VMEM-resident ping-pong activations when N*H*W*C fits comfortably.
    for _ in range(num_blocks):
        a = _conv_bn_relu_block(a, N, H, W, Cout, Cout, band_res,
                                params["b_res"], params["g_res"], params["be_res"],
                                residual_rows=a)
    return jnp.transpose(a.reshape(N, H, W, Cout), (0, 3, 1, 2))  # NHWC -> NCHW


# ----------------------------------------------------------------------------
# Pure-JAX f32 reference for correctness checking.
# ----------------------------------------------------------------------------
def _ref_block(x_nhwc, w_hwio, bias, gamma, beta, residual=None):
    y = lax.conv_general_dilated(
        x_nhwc, w_hwio, window_strides=(1, 1), padding="SAME",
        dimension_numbers=("NHWC", "HWIO", "NHWC")) + bias
    mean = jnp.mean(y, axis=(0, 1, 2), keepdims=True)
    var = jnp.mean(jnp.square(y - mean), axis=(0, 1, 2), keepdims=True)
    y = (y - mean) * lax.rsqrt(var + EPS) * gamma + beta
    if residual is not None:
        y = y + residual
    return jnp.maximum(y, 0.0)


def resnet_encoder_reference(x_nchw, params, num_blocks):
    x = jnp.transpose(x_nchw, (0, 2, 3, 1))
    x = _ref_block(x, params["w_in"], params["b_in"], params["g_in"], params["be_in"])
    for _ in range(num_blocks):
        x = _ref_block(x, params["w_res"], params["b_res"],
                       params["g_res"], params["be_res"], residual=x)
    return jnp.transpose(x, (0, 3, 1, 2))


if __name__ == "__main__":
    key = jax.random.PRNGKey(0)
    k_x, k_p = jax.random.split(key)

    N, in_channels, H, W = 2, 4, 16, 16
    num_filters, num_blocks = 8, 2

    x = jax.random.normal(k_x, (N, in_channels, H, W), jnp.float32)  # NCHW input
    params = init_params(k_p, in_channels, num_filters)

    fwd = jax.jit(functools.partial(resnet_encoder_forward, num_blocks=num_blocks))
    out = jax.block_until_ready(fwd(x, params))

    assert out.shape == (N, num_filters, H, W), out.shape
    ref = resnet_encoder_reference(x, params, num_blocks)
    max_err = float(jnp.max(jnp.abs(out - ref)))
    # bf16 MXU operands -> slightly looser tolerance than pure-f32.
    assert max_err < 5e-2, f"mismatch vs reference: {max_err}"

    print("KERNEL_OK")
</pallas_src>

<mosaic_0001>
module attributes {stable_mosaic.version = 11 : i64} {
  func.func @_conv_stats_kernel(%arg0: i32, %arg1: memref<1x18x72xf32, #tpu.memory_space<vmem>>, %arg2: memref<3x72x128xbf16, #tpu.memory_space<vmem>>, %arg3: memref<1x128xf32, #tpu.memory_space<vmem>>, %arg4: memref<1x16x128xf32, #tpu.memory_space<vmem>>, %arg5: memref<1x128xf32, #tpu.memory_space<vmem>>, %arg6: memref<1x128xf32, #tpu.memory_space<vmem>>) attributes {dimension_semantics = [#tpu.dimension_semantics<arbitrary>], iteration_bounds = array<i64: 2>, scalar_prefetch = 0 : i64, scratch_operands = 0 : i64, tpu.core_type = #tpu.core_type<tc>, window_params = [{transform_indices = @transform_0, window_bounds = array<i64: 1, 18, 72>}, {pipeline_mode = #tpu.pipeline_mode<synchronous>, transform_indices = @transform_1, window_bounds = array<i64: 3, 72, 128>}, {pipeline_mode = #tpu.pipeline_mode<synchronous>, transform_indices = @transform_2, window_bounds = array<i64: 1, 128>}, {transform_indices = @transform_3, window_bounds = array<i64: 1, 16, 128>}, {pipeline_mode = #tpu.pipeline_mode<synchronous>, transform_indices = @transform_4, window_bounds = array<i64: 1, 128>}, {pipeline_mode = #tpu.pipeline_mode<synchronous>, transform_indices = @transform_5, window_bounds = array<i64: 1, 128>}]} {
    %cst = arith.constant 0.000000e+00 : f32
    %0 = vector.broadcast %cst : f32 to vector<16x128xf32>
    %c0 = arith.constant 0 : index
    %c0_0 = arith.constant 0 : index
    %c0_1 = arith.constant 0 : index
    %1 = vector.load %arg1[%c0, %c0_0, %c0_1] : memref<1x18x72xf32, #tpu.memory_space<vmem>>, vector<1x16x72xf32>
    %2 = vector.shape_cast %1 : vector<1x16x72xf32> to vector<16x72xf32>
    %3 = arith.truncf %2 : vector<16x72xf32> to vector<16x72xbf16>
    %c0_2 = arith.constant 0 : index
    %c0_3 = arith.constant 0 : index
    %c0_4 = arith.constant 0 : index
    %4 = vector.load %arg2[%c0_2, %c0_3, %c0_4] : memref<3x72x128xbf16, #tpu.memory_space<vmem>>, vector<1x72x128xbf16>
    %5 = vector.shape_cast %4 : vector<1x72x128xbf16> to vector<72x128xbf16>
    %cst_5 = arith.constant dense<0.000000e+00> : vector<16x128xf32>
    %6 = tpu.matmul %3, %5, %cst_5 {dimension_numbers = #tpu.dot_dimension_numbers<[1], [0], [0], [1], [0, 0, 1, 1], [], []>} : vector<16x72xbf16>, vector<72x128xbf16>, vector<16x128xf32> -> vector<16x128xf32>
    %7 = arith.addf %0, %6 : vector<16x128xf32>
    %c0_6 = arith.constant 0 : index
    %c1 = arith.constant 1 : index
    %c0_7 = arith.constant 0 : index
    %8 = vector.load %arg1[%c0_6, %c1, %c0_7] : memref<1x18x72xf32, #tpu.memory_space<vmem>>, vector<1x16x72xf32>
    %9 = vector.shape_cast %8 : vector<1x16x72xf32> to vector<16x72xf32>
    %10 = arith.truncf %9 : vector<16x72xf32> to vector<16x72xbf16>
    %c1_8 = arith.constant 1 : index
    %c0_9 = arith.constant 0 : index
    %c0_10 = arith.constant 0 : index
    %11 = vector.load %arg2[%c1_8, %c0_9, %c0_10] : memref<3x72x128xbf16, #tpu.memory_space<vmem>>, vector<1x72x128xbf16>
    %12 = vector.shape_cast %11 : vector<1x72x128xbf16> to vector<72x128xbf16>
    %cst_11 = arith.constant dense<0.000000e+00> : vector<16x128xf32>
    %13 = tpu.matmul %10, %12, %cst_11 {dimension_numbers = #tpu.dot_dimension_numbers<[1], [0], [0], [1], [0, 0, 1, 1], [], []>} : vector<16x72xbf16>, vector<72x128xbf16>, vector<16x128xf32> -> vector<16x128xf32>
    %14 = arith.addf %7, %13 : vector<16x128xf32>
    %c0_12 = arith.constant 0 : index
    %c2 = arith.constant 2 : index
    %c0_13 = arith.constant 0 : index
    %15 = vector.load %arg1[%c0_12, %c2, %c0_13] : memref<1x18x72xf32, #tpu.memory_space<vmem>>, vector<1x16x72xf32>
    %16 = vector.shape_cast %15 : vector<1x16x72xf32> to vector<16x72xf32>
    %17 = arith.truncf %16 : vector<16x72xf32> to vector<16x72xbf16>
    %c2_14 = arith.constant 2 : index
    %c0_15 = arith.constant 0 : index
    %c0_16 = arith.constant 0 : index
    %18 = vector.load %arg2[%c2_14, %c0_15, %c0_16] : memref<3x72x128xbf16, #tpu.memory_space<vmem>>, vector<1x72x128xbf16>
    %19 = vector.shape_cast %18 : vector<1x72x128xbf16> to vector<72x128xbf16>
    %cst_17 = arith.constant dense<0.000000e+00> : vector<16x128xf32>
    %20 = tpu.matmul %17, %19, %cst_17 {dimension_numbers = #tpu.dot_dimension_numbers<[1], [0], [0], [1], [0, 0, 1, 1], [], []>} : vector<16x72xbf16>, vector<72x128xbf16>, vector<16x128xf32> -> vector<16x128xf32>
    %21 = arith.addf %14, %20 : vector<16x128xf32>
    %c0_18 = arith.constant 0 : index
    %c0_19 = arith.constant 0 : index
    %22 = vector.load %arg3[%c0_18, %c0_19] : memref<1x128xf32, #tpu.memory_space<vmem>>, vector<1x128xf32>
    %23 = vector.broadcast %22 : vector<1x128xf32> to vector<16x128xf32>
    %24 = arith.addf %21, %23 : vector<16x128xf32>
    %c0_i32 = arith.constant 0 : i32
    %25 = arith.cmpi eq, %arg0, %c0_i32 : i32
    %26 = arith.extui %25 : i1 to i32
    %c0_i32_20 = arith.constant 0 : i32
    %27 = arith.cmpi ne, %26, %c0_i32_20 : i32
    scf.if %27 {
      %cst_34 = arith.constant 0.000000e+00 : f32
      %42 = vector.broadcast %cst_34 : f32 to vector<1x128xf32>
      %c0_35 = arith.constant 0 : index
      %c0_36 = arith.constant 0 : index
      %43 = vector.load %arg5[%c0_35, %c0_36] : memref<1x128xf32, #tpu.memory_space<vmem>>, vector<1x128xf32>
      tpu.vector_store %arg5[%c0_35, %c0_36], %42 {strides = array<i32>} : memref<1x128xf32, #tpu.memory_space<vmem>>, vector<1x128xf32>,
      %cst_37 = arith.constant 0.000000e+00 : f32
      %44 = vector.broadcast %cst_37 : f32 to vector<1x128xf32>
      %c0_38 = arith.constant 0 : index
      %c0_39 = arith.constant 0 : index
      %45 = vector.load %arg6[%c0_38, %c0_39] : memref<1x128xf32, #tpu.memory_space<vmem>>, vector<1x128xf32>
      tpu.vector_store %arg6[%c0_38, %c0_39], %44 {strides = array<i32>} : memref<1x128xf32, #tpu.memory_space<vmem>>, vector<1x128xf32>,
    } else {
    }
    %c0_21 = arith.constant 0 : index
    %c0_22 = arith.constant 0 : index
    %28 = vector.load %arg5[%c0_21, %c0_22] : memref<1x128xf32, #tpu.memory_space<vmem>>, vector<1x128xf32>
    %cst_23 = arith.constant dense<0.000000e+00> : vector<128xf32>
    %29 = vector.multi_reduction <add>, %24, %cst_23 [0] : vector<16x128xf32> to vector<128xf32>
    %30 = vector.shape_cast %29 : vector<128xf32> to vector<1x128xf32>
    %31 = arith.addf %28, %30 : vector<1x128xf32>
    %c0_24 = arith.constant 0 : index
    %c0_25 = arith.constant 0 : index
    %32 = vector.load %arg5[%c0_24, %c0_25] : memref<1x128xf32, #tpu.memory_space<vmem>>, vector<1x128xf32>
    tpu.vector_store %arg5[%c0_24, %c0_25], %31 {strides = array<i32>} : memref<1x128xf32, #tpu.memory_space<vmem>>, vector<1x128xf32>,
    %c0_26 = arith.constant 0 : index
    %c0_27 = arith.constant 0 : index
    %33 = vector.load %arg6[%c0_26, %c0_27] : memref<1x128xf32, #tpu.memory_space<vmem>>, vector<1x128xf32>
    %34 = arith.mulf %24, %24 : vector<16x128xf32>
    %cst_28 = arith.constant dense<0.000000e+00> : vector<128xf32>
    %35 = vector.multi_reduction <add>, %34, %cst_28 [0] : vector<16x128xf32> to vector<128xf32>
    %36 = vector.shape_cast %35 : vector<128xf32> to vector<1x128xf32>
    %37 = arith.addf %33, %36 : vector<1x128xf32>
    %c0_29 = arith.constant 0 : index
    %c0_30 = arith.constant 0 : index
    %38 = vector.load %arg6[%c0_29, %c0_30] : memref<1x128xf32, #tpu.memory_space<vmem>>, vector<1x128xf32>
    tpu.vector_store %arg6[%c0_29, %c0_30], %37 {strides = array<i32>} : memref<1x128xf32, #tpu.memory_space<vmem>>, vector<1x128xf32>,
    %c0_31 = arith.constant 0 : index
    %c0_32 = arith.constant 0 : index
    %c0_33 = arith.constant 0 : index
    %39 = vector.load %arg4[%c0_31, %c0_32, %c0_33] : memref<1x16x128xf32, #tpu.memory_space<vmem>>, vector<1x16x128xf32>
    %40 = vector.shape_cast %39 : vector<1x16x128xf32> to vector<16x128xf32>
    %41 = vector.shape_cast %24 : vector<16x128xf32> to vector<1x16x128xf32>
    tpu.vector_store %arg4[%c0_31, %c0_32, %c0_33], %41 {strides = array<i32>} : memref<1x16x128xf32, #tpu.memory_space<vmem>>, vector<1x16x128xf32>,
    return
  }
  func.func @transform_0(%arg0: i32) -> (i32, i32, i32) {
    %c0_i32 = arith.constant 0 : i32
    %c0_i32_0 = arith.constant 0 : i32
    %c0_i32_1 = arith.constant 0 : i32
    return %arg0, %c0_i32, %c0_i32_0 : i32, i32, i32
  }
  func.func @transform_1(%arg0: i32) -> (i32, i32, i32) {
    %c0_i32 = arith.constant 0 : i32
    %c0_i32_0 = arith.constant 0 : i32
    %c0_i32_1 = arith.constant 0 : i32
    %c0_i32_2 = arith.constant 0 : i32
    return %c0_i32, %c0_i32_0, %c0_i32_1 : i32, i32, i32
  }
  func.func @transform_2(%arg0: i32) -> (i32, i32) {
    %c0_i32 = arith.constant 0 : i32
    %c0_i32_0 = arith.constant 0 : i32
    %c0_i32_1 = arith.constant 0 : i32
    return %c0_i32, %c0_i32_0 : i32, i32
  }
  func.func @transform_3(%arg0: i32) -> (i32, i32, i32) {
    %c0_i32 = arith.constant 0 : i32
    %c0_i32_0 = arith.constant 0 : i32
    %c0_i32_1 = arith.constant 0 : i32
    return %arg0, %c0_i32, %c0_i32_0 : i32, i32, i32
  }
  func.func @transform_4(%arg0: i32) -> (i32, i32) {
    %c0_i32 = arith.constant 0 : i32
    %c0_i32_0 = arith.constant 0 : i32
    %c0_i32_1 = arith.constant 0 : i32
    return %c0_i32, %c0_i32_0 : i32, i32
  }
  func.func @transform_5(%arg0: i32) -> (i32, i32) {
    %c0_i32 = arith.constant 0 : i32
    %c0_i32_0 = arith.constant 0 : i32
    %c0_i32_1 = arith.constant 0 : i32
    return %c0_i32, %c0_i32_0 : i32, i32
  }
}

module attributes {stable_mosaic.version = 11 : i64} {
  func.func @_bn_relu_kernel(%arg0: i32, %arg1: memref<32x128xf32, #tpu.memory_space<vmem>>, %arg2: memref<1x128xf32, #tpu.memory_space<vmem>>, %arg3: memref<1x128xf32, #tpu.memory_space<vmem>>, %arg4: memref<32x128xf32, #tpu.memory_space<vmem>>) attributes {dimension_semantics = [#tpu.dimension_semantics<parallel>], iteration_bounds = array<i64: 1>, scalar_prefetch = 0 : i64, scratch_operands = 0 : i64, tpu.core_type = #tpu.core_type<tc>, window_params = [{transform_indices = @transform_0, window_bounds = array<i64: 32, 128>}, {pipeline_mode = #tpu.pipeline_mode<synchronous>, transform_indices = @transform_1, window_bounds = array<i64: 1, 128>}, {pipeline_mode = #tpu.pipeline_mode<synchronous>, transform_indices = @transform_2, window_bounds = array<i64: 1, 128>}, {transform_indices = @transform_3, window_bounds = array<i64: 32, 128>}]} {
    %c0 = arith.constant 0 : index
    %c0_0 = arith.constant 0 : index
    %0 = vector.load %arg1[%c0, %c0_0] : memref<32x128xf32, #tpu.memory_space<vmem>>, vector<32x128xf32>
    %c0_1 = arith.constant 0 : index
    %c0_2 = arith.constant 0 : index
    %1 = vector.load %arg2[%c0_1, %c0_2] : memref<1x128xf32, #tpu.memory_space<vmem>>, vector<1x128xf32>
    %2 = vector.broadcast %1 : vector<1x128xf32> to vector<32x128xf32>
    %3 = arith.mulf %0, %2 : vector<32x128xf32>
    %c0_3 = arith.constant 0 : index
    %c0_4 = arith.constant 0 : index
    %4 = vector.load %arg3[%c0_3, %c0_4] : memref<1x128xf32, #tpu.memory_space<vmem>>, vector<1x128xf32>
    %5 = vector.broadcast %4 : vector<1x128xf32> to vector<32x128xf32>
    %6 = arith.addf %3, %5 : vector<32x128xf32>
    %cst = arith.constant 0.000000e+00 : f32
    %7 = vector.broadcast %cst : f32 to vector<32x128xf32>
    %8 = arith.maximumf %6, %7 : vector<32x128xf32>
    %c0_5 = arith.constant 0 : index
    %c0_6 = arith.constant 0 : index
    %9 = vector.load %arg4[%c0_5, %c0_6] : memref<32x128xf32, #tpu.memory_space<vmem>>, vector<32x128xf32>
    tpu.vector_store %arg4[%c0_5, %c0_6], %8 {strides = array<i32>} : memref<32x128xf32, #tpu.memory_space<vmem>>, vector<32x128xf32>,
    return
  }
  func.func @transform_0(%arg0: i32) -> (i32, i32) {
    %c0_i32 = arith.constant 0 : i32
    %c0_i32_0 = arith.constant 0 : i32
    return %arg0, %c0_i32 : i32, i32
  }
  func.func @transform_1(%arg0: i32) -> (i32, i32) {
    %c0_i32 = arith.constant 0 : i32
    %c0_i32_0 = arith.constant 0 : i32
    %c0_i32_1 = arith.constant 0 : i32
    return %c0_i32, %c0_i32_0 : i32, i32
  }
  func.func @transform_2(%arg0: i32) -> (i32, i32) {
    %c0_i32 = arith.constant 0 : i32
    %c0_i32_0 = arith.constant 0 : i32
    %c0_i32_1 = arith.constant 0 : i32
    return %c0_i32, %c0_i32_0 : i32, i32
  }
  func.func @transform_3(%arg0: i32) -> (i32, i32) {
    %c0_i32 = arith.constant 0 : i32
    %c0_i32_0 = arith.constant 0 : i32
    return %arg0, %c0_i32 : i32, i32
  }
}

module attributes {stable_mosaic.version = 11 : i64} {
  func.func @_bn_res_relu_kernel(%arg0: i32, %arg1: memref<32x128xf32, #tpu.memory_space<vmem>>, %arg2: memref<1x128xf32, #tpu.memory_space<vmem>>, %arg3: memref<1x128xf32, #tpu.memory_space<vmem>>, %arg4: memref<32x128xf32, #tpu.memory_space<vmem>>, %arg5: memref<32x128xf32, #tpu.memory_space<vmem>>) attributes {dimension_semantics = [#tpu.dimension_semantics<parallel>], iteration_bounds = array<i64: 1>, scalar_prefetch = 0 : i64, scratch_operands = 0 : i64, tpu.core_type = #tpu.core_type<tc>, window_params = [{transform_indices = @transform_0, window_bounds = array<i64: 32, 128>}, {pipeline_mode = #tpu.pipeline_mode<synchronous>, transform_indices = @transform_1, window_bounds = array<i64: 1, 128>}, {pipeline_mode = #tpu.pipeline_mode<synchronous>, transform_indices = @transform_2, window_bounds = array<i64: 1, 128>}, {transform_indices = @transform_3, window_bounds = array<i64: 32, 128>}, {transform_indices = @transform_4, window_bounds = array<i64: 32, 128>}]} {
    %c0 = arith.constant 0 : index
    %c0_0 = arith.constant 0 : index
    %0 = vector.load %arg1[%c0, %c0_0] : memref<32x128xf32, #tpu.memory_space<vmem>>, vector<32x128xf32>
    %c0_1 = arith.constant 0 : index
    %c0_2 = arith.constant 0 : index
    %1 = vector.load %arg2[%c0_1, %c0_2] : memref<1x128xf32, #tpu.memory_space<vmem>>, vector<1x128xf32>
    %2 = vector.broadcast %1 : vector<1x128xf32> to vector<32x128xf32>
    %3 = arith.mulf %0, %2 : vector<32x128xf32>
    %c0_3 = arith.constant 0 : index
    %c0_4 = arith.constant 0 : index
    %4 = vector.load %arg3[%c0_3, %c0_4] : memref<1x128xf32, #tpu.memory_space<vmem>>, vector<1x128xf32>
    %5 = vector.broadcast %4 : vector<1x128xf32> to vector<32x128xf32>
    %6 = arith.addf %3, %5 : vector<32x128xf32>
    %c0_5 = arith.constant 0 : index
    %c0_6 = arith.constant 0 : index
    %7 = vector.load %arg4[%c0_5, %c0_6] : memref<32x128xf32, #tpu.memory_space<vmem>>, vector<32x128xf32>
    %8 = arith.addf %6, %7 : vector<32x128xf32>
    %cst = arith.constant 0.000000e+00 : f32
    %9 = vector.broadcast %cst : f32 to vector<32x128xf32>
    %10 = arith.maximumf %8, %9 : vector<32x128xf32>
    %c0_7 = arith.constant 0 : index
    %c0_8 = arith.constant 0 : index
    %11 = vector.load %arg5[%c0_7, %c0_8] : memref<32x128xf32, #tpu.memory_space<vmem>>, vector<32x128xf32>
    tpu.vector_store %arg5[%c0_7, %c0_8], %10 {strides = array<i32>} : memref<32x128xf32, #tpu.memory_space<vmem>>, vector<32x128xf32>,
    return
  }
  func.func @transform_0(%arg0: i32) -> (i32, i32) {
    %c0_i32 = arith.constant 0 : i32
    %c0_i32_0 = arith.constant 0 : i32
    return %arg0, %c0_i32 : i32, i32
  }
  func.func @transform_1(%arg0: i32) -> (i32, i32) {
    %c0_i32 = arith.constant 0 : i32
    %c0_i32_0 = arith.constant 0 : i32
    %c0_i32_1 = arith.constant 0 : i32
    return %c0_i32, %c0_i32_0 : i32, i32
  }
  func.func @transform_2(%arg0: i32) -> (i32, i32) {
    %c0_i32 = arith.constant 0 : i32
    %c0_i32_0 = arith.constant 0 : i32
    %c0_i32_1 = arith.constant 0 : i32
    return %c0_i32, %c0_i32_0 : i32, i32
  }
  func.func @transform_3(%arg0: i32) -> (i32, i32) {
    %c0_i32 = arith.constant 0 : i32
    %c0_i32_0 = arith.constant 0 : i32
    return %arg0, %c0_i32 : i32, i32
  }
  func.func @transform_4(%arg0: i32) -> (i32, i32) {
    %c0_i32 = arith.constant 0 : i32
    %c0_i32_0 = arith.constant 0 : i32
    return %arg0, %c0_i32 : i32, i32
  }
}

module attributes {stable_mosaic.version = 11 : i64} {
  func.func @_conv_stats_kernel(%arg0: i32, %arg1: memref<1x18x144xf32, #tpu.memory_space<vmem>>, %arg2: memref<3x144x128xbf16, #tpu.memory_space<vmem>>, %arg3: memref<1x128xf32, #tpu.memory_space<vmem>>, %arg4: memref<1x16x128xf32, #tpu.memory_space<vmem>>, %arg5: memref<1x128xf32, #tpu.memory_space<vmem>>, %arg6: memref<1x128xf32, #tpu.memory_space<vmem>>) attributes {dimension_semantics = [#tpu.dimension_semantics<arbitrary>], iteration_bounds = array<i64: 2>, scalar_prefetch = 0 : i64, scratch_operands = 0 : i64, tpu.core_type = #tpu.core_type<tc>, window_params = [{transform_indices = @transform_0, window_bounds = array<i64: 1, 18, 144>}, {pipeline_mode = #tpu.pipeline_mode<synchronous>, transform_indices = @transform_1, window_bounds = array<i64: 3, 144, 128>}, {pipeline_mode = #tpu.pipeline_mode<synchronous>, transform_indices = @transform_2, window_bounds = array<i64: 1, 128>}, {transform_indices = @transform_3, window_bounds = array<i64: 1, 16, 128>}, {pipeline_mode = #tpu.pipeline_mode<synchronous>, transform_indices = @transform_4, window_bounds = array<i64: 1, 128>}, {pipeline_mode = #tpu.pipeline_mode<synchronous>, transform_indices = @transform_5, window_bounds = array<i64: 1, 128>}]} {
    %cst = arith.constant 0.000000e+00 : f32
    %0 = vector.broadcast %cst : f32 to vector<16x128xf32>
    %c0 = arith.constant 0 : index
    %c0_0 = arith.constant 0 : index
    %c0_1 = arith.constant 0 : index
    %1 = vector.load %arg1[%c0, %c0_0, %c0_1] : memref<1x18x144xf32, #tpu.memory_space<vmem>>, vector<1x16x144xf32>
    %2 = vector.shape_cast %1 : vector<1x16x144xf32> to vector<16x144xf32>
    %3 = arith.truncf %2 : vector<16x144xf32> to vector<16x144xbf16>
    %c0_2 = arith.constant 0 : index
    %c0_3 = arith.constant 0 : index
    %c0_4 = arith.constant 0 : index
    %4 = vector.load %arg2[%c0_2, %c0_3, %c0_4] : memref<3x144x128xbf16, #tpu.memory_space<vmem>>, vector<1x144x128xbf16>
    %5 = vector.shape_cast %4 : vector<1x144x128xbf16> to vector<144x128xbf16>
    %cst_5 = arith.constant dense<0.000000e+00> : vector<16x128xf32>
    %6 = tpu.matmul %3, %5, %cst_5 {dimension_numbers = #tpu.dot_dimension_numbers<[1], [0], [0], [1], [0, 0, 1, 1], [], []>} : vector<16x144xbf16>, vector<144x128xbf16>, vector<16x128xf32> -> vector<16x128xf32>
    %7 = arith.addf %0, %6 : vector<16x128xf32>
    %c0_6 = arith.constant 0 : index
    %c1 = arith.constant 1 : index
    %c0_7 = arith.constant 0 : index
    %8 = vector.load %arg1[%c0_6, %c1, %c0_7] : memref<1x18x144xf32, #tpu.memory_space<vmem>>, vector<1x16x144xf32>
    %9 = vector.shape_cast %8 : vector<1x16x144xf32> to vector<16x144xf32>
    %10 = arith.truncf %9 : vector<16x144xf32> to vector<16x144xbf16>
    %c1_8 = arith.constant 1 : index
    %c0_9 = arith.constant 0 : index
    %c0_10 = arith.constant 0 : index
    %11 = vector.load %arg2[%c1_8, %c0_9, %c0_10] : memref<3x144x128xbf16, #tpu.memory_space<vmem>>, vector<1x144x128xbf16>
    %12 = vector.shape_cast %11 : vector<1x144x128xbf16> to vector<144x128xbf16>
    %cst_11 = arith.constant dense<0.000000e+00> : vector<16x128xf32>
    %13 = tpu.matmul %10, %12, %cst_11 {dimension_numbers = #tpu.dot_dimension_numbers<[1], [0], [0], [1], [0, 0, 1, 1], [], []>} : vector<16x144xbf16>, vector<144x128xbf16>, vector<16x128xf32> -> vector<16x128xf32>
    %14 = arith.addf %7, %13 : vector<16x128xf32>
    %c0_12 = arith.constant 0 : index
    %c2 = arith.constant 2 : index
    %c0_13 = arith.constant 0 : index
    %15 = vector.load %arg1[%c0_12, %c2, %c0_13] : memref<1x18x144xf32, #tpu.memory_space<vmem>>, vector<1x16x144xf32>
    %16 = vector.shape_cast %15 : vector<1x16x144xf32> to vector<16x144xf32>
    %17 = arith.truncf %16 : vector<16x144xf32> to vector<16x144xbf16>
    %c2_14 = arith.constant 2 : index
    %c0_15 = arith.constant 0 : index
    %c0_16 = arith.constant 0 : index
    %18 = vector.load %arg2[%c2_14, %c0_15, %c0_16] : memref<3x144x128xbf16, #tpu.memory_space<vmem>>, vector<1x144x128xbf16>
    %19 = vector.shape_cast %18 : vector<1x144x128xbf16> to vector<144x128xbf16>
    %cst_17 = arith.constant dense<0.000000e+00> : vector<16x128xf32>
    %20 = tpu.matmul %17, %19, %cst_17 {dimension_numbers = #tpu.dot_dimension_numbers<[1], [0], [0], [1], [0, 0, 1, 1], [], []>} : vector<16x144xbf16>, vector<144x128xbf16>, vector<16x128xf32> -> vector<16x128xf32>
    %21 = arith.addf %14, %20 : vector<16x128xf32>
    %c0_18 = arith.constant 0 : index
    %c0_19 = arith.constant 0 : index
    %22 = vector.load %arg3[%c0_18, %c0_19] : memref<1x128xf32, #tpu.memory_space<vmem>>, vector<1x128xf32>
    %23 = vector.broadcast %22 : vector<1x128xf32> to vector<16x128xf32>
    %24 = arith.addf %21, %23 : vector<16x128xf32>
    %c0_i32 = arith.constant 0 : i32
    %25 = arith.cmpi eq, %arg0, %c0_i32 : i32
    %26 = arith.extui %25 : i1 to i32
    %c0_i32_20 = arith.constant 0 : i32
    %27 = arith.cmpi ne, %26, %c0_i32_20 : i32
    scf.if %27 {
      %cst_34 = arith.constant 0.000000e+00 : f32
      %42 = vector.broadcast %cst_34 : f32 to vector<1x128xf32>
      %c0_35 = arith.constant 0 : index
      %c0_36 = arith.constant 0 : index
      %43 = vector.load %arg5[%c0_35, %c0_36] : memref<1x128xf32, #tpu.memory_space<vmem>>, vector<1x128xf32>
      tpu.vector_store %arg5[%c0_35, %c0_36], %42 {strides = array<i32>} : memref<1x128xf32, #tpu.memory_space<vmem>>, vector<1x128xf32>,
      %cst_37 = arith.constant 0.000000e+00 : f32
      %44 = vector.broadcast %cst_37 : f32 to vector<1x128xf32>
      %c0_38 = arith.constant 0 : index
      %c0_39 = arith.constant 0 : index
      %45 = vector.load %arg6[%c0_38, %c0_39] : memref<1x128xf32, #tpu.memory_space<vmem>>, vector<1x128xf32>
      tpu.vector_store %arg6[%c0_38, %c0_39], %44 {strides = array<i32>} : memref<1x128xf32, #tpu.memory_space<vmem>>, vector<1x128xf32>,
    } else {
    }
    %c0_21 = arith.constant 0 : index
    %c0_22 = arith.constant 0 : index
    %28 = vector.load %arg5[%c0_21, %c0_22] : memref<1x128xf32, #tpu.memory_space<vmem>>, vector<1x128xf32>
    %cst_23 = arith.constant dense<0.000000e+00> : vector<128xf32>
    %29 = vector.multi_reduction <add>, %24, %cst_23 [0] : vector<16x128xf32> to vector<128xf32>
    %30 = vector.shape_cast %29 : vector<128xf32> to vector<1x128xf32>
    %31 = arith.addf %28, %30 : vector<1x128xf32>
    %c0_24 = arith.constant 0 : index
    %c0_25 = arith.constant 0 : index
    %32 = vector.load %arg5[%c0_24, %c0_25] : memref<1x128xf32, #tpu.memory_space<vmem>>, vector<1x128xf32>
    tpu.vector_store %arg5[%c0_24, %c0_25], %31 {strides = array<i32>} : memref<1x128xf32, #tpu.memory_space<vmem>>, vector<1x128xf32>,
    %c0_26 = arith.constant 0 : index
    %c0_27 = arith.constant 0 : index
    %33 = vector.load %arg6[%c0_26, %c0_27] : memref<1x128xf32, #tpu.memory_space<vmem>>, vector<1x128xf32>
    %34 = arith.mulf %24, %24 : vector<16x128xf32>
    %cst_28 = arith.constant dense<0.000000e+00> : vector<128xf32>
    %35 = vector.multi_reduction <add>, %34, %cst_28 [0] : vector<16x128xf32> to vector<128xf32>
    %36 = vector.shape_cast %35 : vector<128xf32> to vector<1x128xf32>
    %37 = arith.addf %33, %36 : vector<1x128xf32>
    %c0_29 = arith.constant 0 : index
    %c0_30 = arith.constant 0 : index
    %38 = vector.load %arg6[%c0_29, %c0_30] : memref<1x128xf32, #tpu.memory_space<vmem>>, vector<1x128xf32>
    tpu.vector_store %arg6[%c0_29, %c0_30], %37 {strides = array<i32>} : memref<1x128xf32, #tpu.memory_space<vmem>>, vector<1x128xf32>,
    %c0_31 = arith.constant 0 : index
    %c0_32 = arith.constant 0 : index
    %c0_33 = arith.constant 0 : index
    %39 = vector.load %arg4[%c0_31, %c0_32, %c0_33] : memref<1x16x128xf32, #tpu.memory_space<vmem>>, vector<1x16x128xf32>
    %40 = vector.shape_cast %39 : vector<1x16x128xf32> to vector<16x128xf32>
    %41 = vector.shape_cast %24 : vector<16x128xf32> to vector<1x16x128xf32>
    tpu.vector_store %arg4[%c0_31, %c0_32, %c0_33], %41 {strides = array<i32>} : memref<1x16x128xf32, #tpu.memory_space<vmem>>, vector<1x16x128xf32>,
    return
  }
  func.func @transform_0(%arg0: i32) -> (i32, i32, i32) {
    %c0_i32 = arith.constant 0 : i32
    %c0_i32_0 = arith.constant 0 : i32
    %c0_i32_1 = arith.constant 0 : i32
    return %arg0, %c0_i32, %c0_i32_0 : i32, i32, i32
  }
  func.func @transform_1(%arg0: i32) -> (i32, i32, i32) {
    %c0_i32 = arith.constant 0 : i32
    %c0_i32_0 = arith.constant 0 : i32
    %c0_i32_1 = arith.constant 0 : i32
    %c0_i32_2 = arith.constant 0 : i32
    return %c0_i32, %c0_i32_0, %c0_i32_1 : i32, i32, i32
  }
  func.func @transform_2(%arg0: i32) -> (i32, i32) {
    %c0_i32 = arith.constant 0 : i32
    %c0_i32_0 = arith.constant 0 : i32
    %c0_i32_1 = arith.constant 0 : i32
    return %c0_i32, %c0_i32_0 : i32, i32
  }
  func.func @transform_3(%arg0: i32) -> (i32, i32, i32) {
    %c0_i32 = arith.constant 0 : i32
    %c0_i32_0 = arith.constant 0 : i32
    %c0_i32_1 = arith.constant 0 : i32
    return %arg0, %c0_i32, %c0_i32_0 : i32, i32, i32
  }
  func.func @transform_4(%arg0: i32) -> (i32, i32) {
    %c0_i32 = arith.constant 0 : i32
    %c0_i32_0 = arith.constant 0 : i32
    %c0_i32_1 = arith.constant 0 : i32
    return %c0_i32, %c0_i32_0 : i32, i32
  }
  func.func @transform_5(%arg0: i32) -> (i32, i32) {
    %c0_i32 = arith.constant 0 : i32
    %c0_i32_0 = arith.constant 0 : i32
    %c0_i32_1 = arith.constant 0 : i32
    return %c0_i32, %c0_i32_0 : i32, i32
  }
}

</mosaic_0001>

<llo_original>
// kernel: tile.48
$region0: #{tile.48}
  #allocation0 [shape = 's32[1]{0}', space=sflag, size = 0x4, scoped, tag = 'scoped memory for tile.48']
  %s0 = inlined_call_operand.vmem [shape: f32[8], index: 0, kind: input, shape index: {}]
  %s1 = inlined_call_operand.vmem [shape: f32[16,8], index: 1, kind: output, shape index: {}]
  // Predicated region
  $region2: #{tile.48} parent=0 // pred_check
    _
  $region3: #{tile.48} parent=0 // pred_check_branch
    %3 = sbr.rel (0) target = $region5
  $region4: #{tile.48} parent=0 // pred_region
    _
  $region5: #{tile.48} parent=0 // pred_fallthru
    _
  %v4 = vld [vmem:[%s0] ss:$0 sm:$0xff]
  %5 = vst [vmem:[%s1] sm:$0xff] %v4
  %s6 = scalar_lea.vmem %s1, 8
  %7 = vst [vmem:[%s6] sm:$0xff] %v4

// kernel: tile.49
$region0: #{tile.49}
  %s0 = inlined_call_operand.vmem [shape: f32[16,8], index: 0, kind: input, shape index: {}]
  %s1 = inlined_call_operand.vmem [shape: f32[1,128], index: 1, kind: output, shape index: {}]
  $region1: #{tile.49} parent=0
    #allocation0 [shape = 'u8[4096]{0}', space=vmem, size = 0x1000, scoped, tag = 'scoped mem for output reshape']
    %v2 = vld [vmem:[%s0] sm:$0x1]
    %vm3 = vcmask 64512
    %4 = vst.msk [vmem:[#allocation0] sm:$0x1] %vm3, %v2
    %s5 = scalar_lea.vmem %s0, 15
    %v6 = vld [vmem:[%s5] sm:$0x1]
    %7 = vrot.lane.b32.xlu0 %v6, 120
    %v8 = vpop.permute.xlu0 %7
    %vm9 = vcmask 1048512
    %10 = vst.msk [vmem:[#allocation0] sm:$0x1] %vm9, %v8
    %s11 = scalar_lea.vmem %s0, 14
    %v12 = vld [vmem:[%s11] sm:$0x1]
    %13 = vrot.lane.b32.xlu0 %v12, 112
    %v14 = vpop.permute.xlu0 %13
    %vm15 = vcmask 982912
    %16 = vst.msk [vmem:[#allocation0] sm:$0x1] %vm15, %v14
    %s17 = scalar_lea.vmem %s0, 13
    %v18 = vld [vmem:[%s17] sm:$0x1]
    %19 = vrot.lane.b32.xlu0 %v18, 104
    %v20 = vpop.permute.xlu0 %19
    %vm21 = vcmask 917312
    %22 = vst.msk [vmem:[#allocation0] sm:$0x1] %vm21, %v20
    %s23 = scalar_lea.vmem %s0, 12
    %v24 = vld [vmem:[%s23] sm:$0x1]
    %25 = vrot.lane.b32.xlu0 %v24, 96
    %v26 = vpop.permute.xlu0 %25
    %vm27 = vcmask 851712
    %28 = vst.msk [vmem:[#allocation0] sm:$0x1] %vm27, %v26
    %s29 = scalar_lea.vmem %s0, 11
    %v30 = vld [vmem:[%s29] sm:$0x1]
    %31 = vrot.lane.b32.xlu0 %v30, 88
    %v32 = vpop.permute.xlu0 %31
    %vm33 = vcmask 786112
    %34 = vst.msk [vmem:[#allocation0] sm:$0x1] %vm33, %v32
    %s35 = scalar_lea.vmem %s0, 10
    %v36 = vld [vmem:[%s35] sm:$0x1]
    %37 = vrot.lane.b32.xlu0 %v36, 80
    %v38 = vpop.permute.xlu0 %37
    %vm39 = vcmask 720512
    %40 = vst.msk [vmem:[#allocation0] sm:$0x1] %vm39, %v38
    %s41 = scalar_lea.vmem %s0, 9
    %v42 = vld [vmem:[%s41] sm:$0x1]
    %43 = vrot.lane.b32.xlu0 %v42, 72
    %v44 = vpop.permute.xlu0 %43
    %vm45 = vcmask 654912
    %46 = vst.msk [vmem:[#allocation0] sm:$0x1] %vm45, %v44
    %s47 = scalar_lea.vmem %s0, 8
    %v48 = vld [vmem:[%s47] sm:$0x1]
    %49 = vrot.lane.b32.xlu0 %v48, 64
    %v50 = vpop.permute.xlu0 %49
    %vm51 = vcmask 589312
    %52 = vst.msk [vmem:[#allocation0] sm:$0x1] %vm51, %v50
    %s53 = scalar_lea.vmem %s0, 7
    %v54 = vld [vmem:[%s53] sm:$0x1]
    %55 = vrot.lane.b32.xlu0 %v54, 56
    %v56 = vpop.permute.xlu0 %55
    %vm57 = vcmask 523712
    %58 = vst.msk [vmem:[#allocation0] sm:$0x1] %vm57, %v56
    %s59 = scalar_lea.vmem %s0, 6
    %v60 = vld [vmem:[%s59] sm:$0x1]
    %61 = vrot.lane.b32.xlu0 %v60, 48
    %v62 = vpop.permute.xlu0 %61
    %vm63 = vcmask 458112
    %64 = vst.msk [vmem:[#allocation0] sm:$0x1] %vm63, %v62
    %s65 = scalar_lea.vmem %s0, 5
    %v66 = vld [vmem:[%s65] sm:$0x1]
    %67 = vrot.lane.b32.xlu0 %v66, 40
    %v68 = vpop.permute.xlu0 %67
    %vm69 = vcmask 392512
    %70 = vst.msk [vmem:[#allocation0] sm:$0x1] %vm69, %v68
    %s71 = scalar_lea.vmem %s0, 4
    %v72 = vld [vmem:[%s71] sm:$0x1]
    %73 = vrot.lane.b32.xlu0 %v72, 32
    %v74 = vpop.permute.xlu0 %73
    %vm75 = vcmask 326912
    %76 = vst.msk [vmem:[#allocation0] sm:$0x1] %vm75, %v74
    %s77 = scalar_lea.vmem %s0, 3
    %v78 = vld [vmem:[%s77] sm:$0x1]
    %79 = vrot.lane.b32.xlu0 %v78, 24
    %v80 = vpop.permute.xlu0 %79
    %vm81 = vcmask 261312
    %82 = vst.msk [vmem:[#allocation0] sm:$0x1] %vm81, %v80
    %s83 = scalar_lea.vmem %s0, 2
    %v84 = vld [vmem:[%s83] sm:$0x1]
    %85 = vrot.lane.b32.xlu0 %v84, 16
    %v86 = vpop.permute.xlu0 %85
    %vm87 = vcmask 195712
    %88 = vst.msk [vmem:[#allocation0] sm:$0x1] %vm87, %v86
    %s89 = scalar_lea.vmem %s0, 1
    %v90 = vld [vmem:[%s89] sm:$0x1]
    %91 = vrot.lane.b32.xlu0 %v90, 8
    %v92 = vpop.permute.xlu0 %91
    %vm93 = vcmask 130112
    %94 = vst.msk [vmem:[#allocation0] sm:$0x1] %vm93, %v92
    %s96 = sshllo.u32 0, 1
    %v98 = vld [vmem:[#allocation0] sm:%s96]
    %s99 = sshllo.u32 0, 1
    %100 = vst [vmem:[%s1] sm:%s99] %v98

// kernel: resnet_encoder_forward.7
$region0: #{resnet_encoder_forward.7}
  #allocation0 [shape = 'u32[]', space=smem, size = 0x4, offset = 0x4, fixed_abs, tag = 'smem constant byte address 0x4 - core index']
  #allocation1 [shape = 'u32[144,128]{1,0:T(1,128)}', space=vmem, size = 0x12000, scoped, tag = 'internal scratch']
  %s0 = inlined_call_operand.vmem [shape: f32[32,128], index: 0, kind: input, shape index: {}]
  %s1 = inlined_call_operand.vmem [shape: f32[1,128], index: 1, kind: input, shape index: {}]
  %s2 = inlined_call_operand.vmem [shape: f32[1,128], index: 2, kind: input, shape index: {}]
  %s3 = inlined_call_operand.vmem [shape: f32[32,128], index: 3, kind: output, shape index: {}]
  %s4 = sld [smem:[#allocation0]]
  $region22: #{resnet_encoder_forward.7} parent=0
    _
  %s6 = ssub.s32 1, %s4
  %s7 = scalar_select 0, %s6, %s4
  // Predicated region
  $region2: #{resnet_encoder_forward.7} parent=0 // pred_check
    _
  $region3: #{resnet_encoder_forward.7} parent=0 // pred_check_branch
    %9 = sbr.rel (0) target = $region5
  $region4: #{resnet_encoder_forward.7} parent=0 // pred_region
    _
  $region5: #{resnet_encoder_forward.7} parent=0 // pred_fallthru
    _
  // Predicated region
  $region6: #{resnet_encoder_forward.7} parent=0 // pred_check
    _
  $region7: #{resnet_encoder_forward.7} parent=0 // pred_check_branch
    %11 = sbr.rel (0) target = $region9
  $region8: #{resnet_encoder_forward.7} parent=0 // pred_region
    _
  $region9: #{resnet_encoder_forward.7} parent=0 // pred_fallthru
    _
  // Predicated region
  $region10: #{resnet_encoder_forward.7} parent=0 // pred_check
    _
  $region11: #{resnet_encoder_forward.7} parent=0 // pred_check_branch
    %13 = sbr.rel (0) target = $region13
  $region12: #{resnet_encoder_forward.7} parent=0 // pred_region
    _
  $region13: #{resnet_encoder_forward.7} parent=0 // pred_fallthru
    _
  %v14 = vld [vmem:[%s0] sm:$0xff]
  %v15 = vld [vmem:[%s0 + $0x8] sm:$0xff]
  %v16 = vld [vmem:[%s0 + $0x10] sm:$0xff]
  %v17 = vld [vmem:[%s0 + $0x18] sm:$0xff]
  %v18 = vld [vmem:[%s1] sm:$0x1]
  %v20 = vlaneseq
  %v21 = vshrl.u32 %v20, 7
  %v22 = vsub.s32 0, %v21
  %v23 = vrot.slane %v18, %v22
  %v25 = vmul.f32 %v14, %v23
  %v26 = vmul.f32 %v15, %v23
  %v27 = vmul.f32 %v16, %v23
  %v28 = vmul.f32 %v17, %v23
  %v29 = vld [vmem:[%s2] sm:$0x1]
  %v31 = vlaneseq
  %v32 = vshrl.u32 %v31, 7
  %v33 = vsub.s32 0, %v32
  %v34 = vrot.slane %v29, %v33
  %v36 = vadd.f32 %v25, %v34
  %v37 = vadd.f32 %v26, %v34
  %v38 = vadd.f32 %v27, %v34
  %v39 = vadd.f32 %v28, %v34
  %v40 = vmax.f32 %v36, 0.0
  %v41 = vmax.f32 %v37, 0.0
  %v42 = vmax.f32 %v38, 0.0
  %v43 = vmax.f32 %v39, 0.0
  %44 = vst [vmem:[%s3] sm:$0xff] %v40
  %45 = vst [vmem:[%s3 + $0x8] sm:$0xff] %v41
  %46 = vst [vmem:[%s3 + $0x10] sm:$0xff] %v42
  %47 = vst [vmem:[%s3 + $0x18] sm:$0xff] %v43
  // Predicated region
  $region14: #{resnet_encoder_forward.7} parent=0 // pred_check
    _
  $region15: #{resnet_encoder_forward.7} parent=0 // pred_check_branch
    %49 = sbr.rel (0) target = $region17
  $region16: #{resnet_encoder_forward.7} parent=0 // pred_region
    _
  $region17: #{resnet_encoder_forward.7} parent=0 // pred_fallthru
    _
  // Predicated region
  $region18: #{resnet_encoder_forward.7} parent=0 // pred_check
    _
  $region19: #{resnet_encoder_forward.7} parent=0 // pred_check_branch
    %51 = sbr.rel (0) target = $region21
  $region20: #{resnet_encoder_forward.7} parent=0 // pred_region
    _
  $region21: #{resnet_encoder_forward.7} parent=0 // pred_fallthru
    _

// kernel: resnet_encoder_forward.6
$region0: #{resnet_encoder_forward.6}
  #allocation0 [shape = 'u32[]', space=smem, size = 0x4, offset = 0x4, fixed_abs, tag = 'smem constant byte address 0x4 - core index']
  #allocation1 [shape = 'u32[144,128]{1,0:T(1,128)}', space=vmem, size = 0x12000, scoped, tag = 'internal scratch']
  %s0 = inlined_call_operand.vmem [shape: f32[2,18,72], index: 0, kind: input, shape index: {}]
  %s1 = inlined_call_operand.vmem [shape: bf16[3,72,128], index: 1, kind: input, shape index: {}]
  %s2 = inlined_call_operand.vmem [shape: f32[1,128], index: 2, kind: input, shape index: {}]
  %s3 = inlined_call_operand.vmem [shape: f32[2,16,128], index: 3, kind: output, shape index: {0}]
  %s4 = inlined_call_operand.vmem [shape: f32[1,128], index: 4, kind: output, shape index: {1}]
  %s5 = inlined_call_operand.vmem [shape: f32[1,128], index: 5, kind: output, shape index: {2}]
  %6 = xla_tuple %s3, %s4, %s5
  %s7 = sld [smem:[#allocation0]]
  $region65: #{resnet_encoder_forward.6} parent=0
    _
  %s9 = ssub.s32 1, %s7
  %s10 = scalar_select 0, %s9, %s7
  loop: start=0, step=1, limit=4
  $region2: #{resnet_encoder_forward.6} parent=0 // loop_pre_header
    _
  $region3: #{resnet_encoder_forward.6} parent=0 // loop_header
    %s12 = sphi 0, %s16
    %p13 = scmp.ge.s32.totalorder %s12, 4
    %s22 = sphi 0, %s24
    %s25 = sphi 0, %s22
    %s26 = sphi 0, %s25
    %s42 = sphi 0, %s26
    %s46 = sphi 0, %s46
    %s48 = sphi 0, %s46
    %s49 = sphi 0, %s48
    %s63 = sphi 0, %s49
    %s67 = sphi 0, %s67
    %s69 = sphi 0, %s67
    %s70 = sphi 0, %s69
    %s84 = sphi 0, %s70
    %s90 = sphi 0, %s92
    %s93 = sphi 0, %s90
    %s94 = sphi 0, %s93
    %s110 = sphi 0, %s94
    %s114 = sphi 0, %s114
    %s116 = sphi 0, %s114
    %s117 = sphi 0, %s116
    %s131 = sphi 0, %s117
    %s135 = sphi 0, %s135
    %s137 = sphi 0, %s135
    %s138 = sphi 0, %s137
    %s152 = sphi 0, %s138
  $region4: #{resnet_encoder_forward.6} parent=0 // loop_header_branch
    %15 = sbr.rel (%p13) target = $region8
  $region5: #{resnet_encoder_forward.6} parent=0 // loop_body
    %s17 = ssub.s32 %s12, 1
    %s18 = ssub.s32 %s12, 2
    %s19 = sadd.s32 %s12, 1
    %s20 = ssub.s32 %s12, %s19
    %p21 = scmp.eq.s32.totalorder %s20, 0
    %s23 = sadd.s32 %s22, 1
    %s24 = scalar_select %p21, %s22, %s23
    %p27 = pneg %p21
    %p28 = scmp.eq.s32.totalorder %s12, 1
    %p29 = por %p27, %p28
    %p30 = scmp.ne.s32.totalorder %s22, %s25
    %p31 = scmp.eq.s32.totalorder %s12, 0
    %p32 = por %p30, %p31
    %p33 = scmp.ne.s32.totalorder %s22, %s25
    %p34 = scmp.eq.s32.totalorder %s17, 1
    %p35 = por %p33, %p34
    %p36 = scmp.ne.s32.totalorder %s25, %s26
    %p37 = scmp.eq.s32.totalorder %s17, 0
    %p38 = por %p36, %p37
    %p39 = scmp.ne.s32.totalorder %s25, %s26
    %p40 = scmp.eq.s32.totalorder %s18, 1
    %p41 = por %p39, %p40
    %p43 = scmp.ne.s32.totalorder %s26, %s42
    %p44 = scmp.eq.s32.totalorder %s18, 0
    %p45 = por %p43, %p44
    %s47 = sadd.s32 %s46, 1
    %p50 = scmp.eq.s32.totalorder %s12, 1
    %p51 = scmp.ne.s32.totalorder %s46, %s48
    %p52 = scmp.eq.s32.totalorder %s12, 0
    %p53 = por %p51, %p52
    %p54 = scmp.ne.s32.totalorder %s46, %s48
    %p55 = scmp.eq.s32.totalorder %s17, 1
    %p56 = por %p54, %p55
    %p57 = scmp.ne.s32.totalorder %s48, %s49
    %p58 = scmp.eq.s32.totalorder %s17, 0
    %p59 = por %p57, %p58
    %p60 = scmp.ne.s32.totalorder %s48, %s49
    %p61 = scmp.eq.s32.totalorder %s18, 1
    %p62 = por %p60, %p61
    %p64 = scmp.ne.s32.totalorder %s49, %s63
    %p65 = scmp.eq.s32.totalorder %s18, 0
    %p66 = por %p64, %p65
    %s68 = sadd.s32 %s67, 1
    %p71 = scmp.eq.s32.totalorder %s12, 1
    %p72 = scmp.ne.s32.totalorder %s67, %s69
    %p73 = scmp.eq.s32.totalorder %s12, 0
    %p74 = por %p72, %p73
    %p75 = scmp.ne.s32.totalorder %s67, %s69
    %p76 = scmp.eq.s32.totalorder %s17, 1
    %p77 = por %p75, %p76
    %p78 = scmp.ne.s32.totalorder %s69, %s70
    %p79 = scmp.eq.s32.totalorder %s17, 0
    %p80 = por %p78, %p79
    %p81 = scmp.ne.s32.totalorder %s69, %s70
    %p82 = scmp.eq.s32.totalorder %s18, 1
    %p83 = por %p81, %p82
    %p85 = scmp.ne.s32.totalorder %s70, %s84
    %p86 = scmp.eq.s32.totalorder %s18, 0
    %p87 = por %p85, %p86
    %s88 = ssub.s32 %s12, %s19
    %p89 = scmp.eq.s32.totalorder %s88, 0
    %s91 = sadd.s32 %s90, 1
    %s92 = scalar_select %p89, %s90, %s91
    %p95 = pneg %p89
    %p96 = scmp.eq.s32.totalorder %s12, 1
    %p97 = por %p95, %p96
    %p98 = scmp.ne.s32.totalorder %s90, %s93
    %p99 = scmp.eq.s32.totalorder %s12, 0
    %p100 = por %p98, %p99
    %p101 = scmp.ne.s32.totalorder %s90, %s93
    %p102 = scmp.eq.s32.totalorder %s17, 1
    %p103 = por %p101, %p102
    %p104 = scmp.ne.s32.totalorder %s93, %s94
    %p105 = scmp.eq.s32.totalorder %s17, 0
    %p106 = por %p104, %p105
    %p107 = scmp.ne.s32.totalorder %s93, %s94
    %p108 = scmp.eq.s32.totalorder %s18, 1
    %p109 = por %p107, %p108
    %p111 = scmp.ne.s32.totalorder %s94, %s110
    %p112 = scmp.eq.s32.totalorder %s18, 0
    %p113 = por %p111, %p112
    %s115 = sadd.s32 %s114, 1
    %p118 = scmp.eq.s32.totalorder %s12, 1
    %p119 = scmp.ne.s32.totalorder %s114, %s116
    %p120 = scmp.eq.s32.totalorder %s12, 0
    %p121 = por %p119, %p120
    %p122 = scmp.ne.s32.totalorder %s114, %s116
    %p123 = scmp.eq.s32.totalorder %s17, 1
    %p124 = por %p122, %p123
    %p125 = scmp.ne.s32.totalorder %s116, %s117
    %p126 = scmp.eq.s32.totalorder %s17, 0
    %p127 = por %p125, %p126
    %p128 = scmp.ne.s32.totalorder %s116, %s117
    %p129 = scmp.eq.s32.totalorder %s18, 1
    %p130 = por %p128, %p129
    %p132 = scmp.ne.s32.totalorder %s117, %s131
    %p133 = scmp.eq.s32.totalorder %s18, 0
    %p134 = por %p132, %p133
    %s136 = sadd.s32 %s135, 1
    %p139 = scmp.eq.s32.totalorder %s12, 1
    %p140 = scmp.ne.s32.totalorder %s135, %s137
    %p141 = scmp.eq.s32.totalorder %s12, 0
    %p142 = por %p140, %p141
    %p143 = scmp.ne.s32.totalorder %s135, %s137
    %p144 = scmp.eq.s32.totalorder %s17, 1
    %p145 = por %p143, %p144
    %p146 = scmp.ne.s32.totalorder %s137, %s138
    %p147 = scmp.eq.s32.totalorder %s17, 0
    %p148 = por %p146, %p147
    %p149 = scmp.ne.s32.totalorder %s137, %s138
    %p150 = scmp.eq.s32.totalorder %s18, 1
    %p151 = por %p149, %p150
    %p153 = scmp.ne.s32.totalorder %s138, %s152
    %p154 = scmp.eq.s32.totalorder %s18, 0
    %p155 = por %p153, %p154
    %p156 = scmp.le.s32.totalorder 1, %s12
    %p157 = scmp.lt.s32.totalorder %s12, 3
    %p158 = pnand %p156, %p157
    %p159 = pneg %p158
    // Predicated region
    $region9: #{resnet_encoder_forward.6} parent=5 // pred_check
      _
    $region10: #{resnet_encoder_forward.6} parent=5 // pred_check_branch
      %161 = sbr.rel (%p158) target = $region12
    $region11: #{resnet_encoder_forward.6} parent=5 // pred_region
      %s162 = ssub.s32 %s12, 1
      // Predicated region
      $region13: #{resnet_encoder_forward.6} parent=11 // pred_check
        %p163 = pneg %p59
      $region14: #{resnet_encoder_forward.6} parent=11 // pred_check_branch
        %165 = sbr.rel (%p163) target = $region16
      $region15: #{resnet_encoder_forward.6} parent=11 // pred_region
        _
      $region16: #{resnet_encoder_forward.6} parent=11 // pred_fallthru
        _
      // Predicated region
      $region17: #{resnet_encoder_forward.6} parent=11 // pred_check
        %p166 = pneg %p80
      $region18: #{resnet_encoder_forward.6} parent=11 // pred_check_branch
        %168 = sbr.rel (%p166) target = $region20
      $region19: #{resnet_encoder_forward.6} parent=11 // pred_region
        _
      $region20: #{resnet_encoder_forward.6} parent=11 // pred_fallthru
        _
    $region12: #{resnet_encoder_forward.6} parent=5 // pred_fallthru
      _
    %p169 = scmp.lt.s32.totalorder %s12, 2
    // Predicated region
    $region21: #{resnet_encoder_forward.6} parent=5 // pred_check
      %p170 = pneg %p169
    $region22: #{resnet_encoder_forward.6} parent=5 // pred_check_branch
      %172 = sbr.rel (%p170) target = $region24
    $region23: #{resnet_encoder_forward.6} parent=5 // pred_region
      // Predicated region
      $region25: #{resnet_encoder_forward.6} parent=23 // pred_check
        %p173 = pneg %p32
      $region26: #{resnet_encoder_forward.6} parent=23 // pred_check_branch
        %175 = sbr.rel (%p173) target = $region28
      $region27: #{resnet_encoder_forward.6} parent=23 // pred_region
        %p176 = scmp.lt.s32.totalorder %s12, 1
        %s177 = scalar_select %p176, %s12, 1
        %s178 = smul.addr %s177, 3
        %s179 = smul.addr %s178, 8
        %s180 = scalar_lea.vmem %s0, %s179
      $region28: #{resnet_encoder_forward.6} parent=23 // pred_fallthru
        _
    $region24: #{resnet_encoder_forward.6} parent=5 // pred_fallthru
      _
    %p181 = scmp.le.s32.totalorder 1, %s12
    %p182 = scmp.lt.s32.totalorder %s12, 3
    %p183 = pnand %p181, %p182
    %p184 = pneg %p183
    // Predicated region
    $region29: #{resnet_encoder_forward.6} parent=5 // pred_check
      _
    $region30: #{resnet_encoder_forward.6} parent=5 // pred_check_branch
      %186 = sbr.rel (%p183) target = $region32
    $region31: #{resnet_encoder_forward.6} parent=5 // pred_region
      %s187 = ssub.s32 %s12, 1
      %p188 = scmp.lt.s32.totalorder %s17, 1
      %s189 = scalar_select %p188, %s17, 1
      %s190 = smul.addr %s189, 3
      %s191 = smul.addr %s190, 8
      %s192 = scalar_lea.vmem %s0, %s191
      %p193 = pneg %p38
      %p194 = pneg %p35
      %p195 = pneg %p59
      %p196 = pneg %p56
      %p197 = pneg %p80
      %p198 = pneg %p77
      %p199 = pneg %p106
      %p200 = pneg %p103
      %p201 = scmp.lt.s32.totalorder %s17, 1
      %s202 = scalar_select %p201, %s17, 1
      %s203 = smul.addr %s202, 2
      %s204 = smul.addr %s203, 8
      %s205 = scalar_lea.vmem %s3, %s204
      %p206 = pneg %p127
      %p207 = pneg %p124
      %p208 = pneg %p148
      %p209 = pneg %p145
      %p210 = scmp.lt.s32.totalorder %s17, 1
      %s211 = scalar_select %p210, %s17, 1
      %s212 = smul.addr %s211, 3
      %s213 = smul.addr %s212, 8
      %s214 = scalar_lea.vmem %s0, %s213
      %p215 = scmp.lt.s32.totalorder %s17, 1
      %s216 = scalar_select %p215, %s17, 1
      %s217 = smul.addr %s216, 2
      %s218 = smul.addr %s217, 8
      %s219 = scalar_lea.vmem %s3, %s218
      %v221 = vld [vmem:[%s214] sm:$0xff]
      %v222 = vld [vmem:[%s214 + $0x8] sm:$0xff]
      %v223 = vpack.c.bf16 %v222, %v221
      %v224 = vld [vmem:[%s1] sm:$0xf]
      %v225 = vld [vmem:[%s1 + $0x4] sm:$0xf]
      %v226 = vld [vmem:[%s1 + $0x8] sm:$0xf]
      %v227 = vld [vmem:[%s1 + $0xc] sm:$0xf]
      %v228 = vld [vmem:[%s1 + $0x10] sm:$0xf]
      %v229 = vld [vmem:[%s1 + $0x14] sm:$0xf]
      %v230 = vld [vmem:[%s1 + $0x18] sm:$0xf]
      %v231 = vld [vmem:[%s1 + $0x1c] sm:$0xf]
      %v232 = vld [vmem:[%s1 + $0x20] sm:$0xf]
      %v233 = vld [vmem:[%s214 + $0x1] sm:$0xff]
      %v234 = vld [vmem:[%s214 + $0x9] sm:$0xff]
      %v235 = vpack.c.bf16 %v234, %v233
      %s236 = scalar_lea.vmem %s1, 36
      %v237 = vld [vmem:[%s236] sm:$0xf]
      %v238 = vld [vmem:[%s236 + $0x4] sm:$0xf]
      %v239 = vld [vmem:[%s236 + $0x8] sm:$0xf]
      %v240 = vld [vmem:[%s236 + $0xc] sm:$0xf]
      %v241 = vld [vmem:[%s236 + $0x10] sm:$0xf]
      %v242 = vld [vmem:[%s236 + $0x14] sm:$0xf]
      %v243 = vld [vmem:[%s236 + $0x18] sm:$0xf]
      %v244 = vld [vmem:[%s236 + $0x1c] sm:$0xf]
      %v245 = vld [vmem:[%s236 + $0x20] sm:$0xf]
      %v255 = vunpack.c.l.b16 %v237
      %v256 = vunpack.c.l.b16 %v238
      %v257 = vunpack.c.l.b16 %v239
      %v258 = vunpack.c.l.b16 %v240
      %v259 = vunpack.c.l.b16 %v241
      %v260 = vunpack.c.l.b16 %v242
      %v261 = vunpack.c.l.b16 %v243
      %v262 = vunpack.c.l.b16 %v244
      %v263 = vunpack.c.l.b16 %v245
      %v264 = vpack.c.b16 %v256, %v255
      %v265 = vpack.c.b16 %v258, %v257
      %v266 = vpack.c.b16 %v260, %v259
      %v267 = vpack.c.b16 %v262, %v261
      %v268 = vpack.c.b16 %v263, %v263
      %vm273 = vcmask 588800
      %v275 = vsel %vm273, %v235, 0
      %vm277 = vcmask 1043456
      %v279 = vsel %vm277, %v268, 0
      %281 = vmatprep.subr.bf16.mxu0 0
      %282 = vmatpush1.bf16.msra.mxu0 %v264
      %283 = vmatprep.subr.bf16.mxu0 0
      %284 = vmatpush1.bf16.msra.mxu0 %v265
      %285 = vmatprep.subr.bf16.mxu0 0
      %286 = vmatpush1.bf16.msra.mxu0 %v266
      %287 = vmatprep.subr.bf16.mxu0 0
      %288 = vmatpush1.bf16.msra.mxu0 %v267
      %289 = vmatprep.subr.bf16.mxu0 0
      %290 = vmatpush1.bf16.msra.mxu0 %v279
      %291 = vmatprep.subr.bf16.mxu0 0
      %292 = vmatpush1.bf16.msra.mxu0 0
      %293 = vmatprep.subr.bf16.mxu0 0
      %294 = vmatpush1.bf16.msra.mxu0 0
      %295 = vmatprep.subr.bf16.mxu0 0
      %296 = vmatpush1.bf16.msra.mxu0 0
      %297 = vmatprep.subr.bf16.mxu0 0
      %298 = vmatpush1.bf16.msra.mxu0 0
      %299 = vmatprep.subr.bf16.mxu0 0
      %300 = vmatpush1.bf16.msra.mxu0 0
      %301 = vmatprep.subr.bf16.mxu0 0
      %302 = vmatpush1.bf16.msra.mxu0 0
      %303 = vmatprep.subr.bf16.mxu0 0
      %304 = vmatpush1.bf16.msra.mxu0 0
      %305 = vmatprep.subr.bf16.mxu0 0
      %306 = vmatpush1.bf16.msra.mxu0 0
      %307 = vmatprep.subr.bf16.mxu0 0
      %308 = vmatpush1.bf16.msra.mxu0 0
      %309 = vmatprep.subr.bf16.mxu0 0
      %310 = vmatpush1.bf16.msra.mxu0 0
      %311 = vmatprep.subr.bf16.mxu0 0
      %312 = vmatpush1.bf16.msra.mxu0 0
      %313 = vmatprep.mubr.bf16.mxu0 0
      %314 = vmatmul.mubr.bf16.gmra.mrb[0].mxu0 %v275
      %v315 = vpop.f32.mrb[0].mxu0
      %v316 = vadd.f32 0.0, %v315
      %v317 = vpop.f32.mrb[0].mxu0
      %v318 = vpop.f32.mrb[0].mxu0
      %v319 = vadd.f32 0.0, %v318
      %v320 = vpop.f32.mrb[0].mxu0
      %321 = vdwg.mxu0
      %v331 = vunpack.c.l.b16 %v224
      %v332 = vunpack.c.l.b16 %v225
      %v333 = vunpack.c.l.b16 %v226
      %v334 = vunpack.c.l.b16 %v227
      %v335 = vunpack.c.l.b16 %v228
      %v336 = vunpack.c.l.b16 %v229
      %v337 = vunpack.c.l.b16 %v230
      %v338 = vunpack.c.l.b16 %v231
      %v339 = vunpack.c.l.b16 %v232
      %v340 = vpack.c.b16 %v332, %v331
      %v341 = vpack.c.b16 %v334, %v333
      %v342 = vpack.c.b16 %v336, %v335
      %v343 = vpack.c.b16 %v338, %v337
      %v344 = vpack.c.b16 %v339, %v339
      %v350 = vsel %vm273, %v223, 0
      %v353 = vsel %vm277, %v344, 0
      %355 = vmatprep.subr.bf16.mxu0 0
      %356 = vmatpush1.bf16.msra.mxu0 %v340
      %357 = vmatprep.subr.bf16.mxu0 0
      %358 = vmatpush1.bf16.msra.mxu0 %v341
      %359 = vmatprep.subr.bf16.mxu0 0
      %360 = vmatpush1.bf16.msra.mxu0 %v342
      %361 = vmatprep.subr.bf16.mxu0 0
      %362 = vmatpush1.bf16.msra.mxu0 %v343
      %363 = vmatprep.subr.bf16.mxu0 0
      %364 = vmatpush1.bf16.msra.mxu0 %v353
      %365 = vmatprep.subr.bf16.mxu0 0
      %366 = vmatpush1.bf16.msra.mxu0 0
      %367 = vmatprep.subr.bf16.mxu0 0
      %368 = vmatpush1.bf16.msra.mxu0 0
      %369 = vmatprep.subr.bf16.mxu0 0
      %370 = vmatpush1.bf16.msra.mxu0 0
      %371 = vmatprep.subr.bf16.mxu0 0
      %372 = vmatpush1.bf16.msra.mxu0 0
      %373 = vmatprep.subr.bf16.mxu0 0
      %374 = vmatpush1.bf16.msra.mxu0 0
      %375 = vmatprep.subr.bf16.mxu0 0
      %376 = vmatpush1.bf16.msra.mxu0 0
      %377 = vmatprep.subr.bf16.mxu0 0
      %378 = vmatpush1.bf16.msra.mxu0 0
      %379 = vmatprep.subr.bf16.mxu0 0
      %380 = vmatpush1.bf16.msra.mxu0 0
      %381 = vmatprep.subr.bf16.mxu0 0
      %382 = vmatpush1.bf16.msra.mxu0 0
      %383 = vmatprep.subr.bf16.mxu0 0
      %384 = vmatpush1.bf16.msra.mxu0 0
      %385 = vmatprep.subr.bf16.mxu0 0
      %386 = vmatpush1.bf16.msra.mxu0 0
      %387 = vmatprep.mubr.bf16.mxu0 0
      %388 = vmatmul.mubr.bf16.gmra.mrb[0].mxu0 %v350
      %v389 = vpop.f32.mrb[0].mxu0
      %v390 = vadd.f32 %v316, %v389
      %v391 = vpop.f32.mrb[0].mxu0
      %v392 = vpop.f32.mrb[0].mxu0
      %v393 = vadd.f32 %v319, %v392
      %v394 = vpop.f32.mrb[0].mxu0
      %395 = vdwg.mxu0
      %v396 = vld [vmem:[%s214 + $0x2] sm:$0xff]
      %v397 = vld [vmem:[%s214 + $0xa] sm:$0xff]
      %v398 = vpack.c.bf16 %v397, %v396
      %s399 = scalar_lea.vmem %s1, 72
      %v400 = vld [vmem:[%s399] sm:$0xf]
      %v401 = vld [vmem:[%s399 + $0x4] sm:$0xf]
      %v402 = vld [vmem:[%s399 + $0x8] sm:$0xf]
      %v403 = vld [vmem:[%s399 + $0xc] sm:$0xf]
      %v404 = vld [vmem:[%s399 + $0x10] sm:$0xf]
      %v405 = vld [vmem:[%s399 + $0x14] sm:$0xf]
      %v406 = vld [vmem:[%s399 + $0x18] sm:$0xf]
      %v407 = vld [vmem:[%s399 + $0x1c] sm:$0xf]
      %v408 = vld [vmem:[%s399 + $0x20] sm:$0xf]
      %v418 = vunpack.c.l.b16 %v400
      %v419 = vunpack.c.l.b16 %v401
      %v420 = vunpack.c.l.b16 %v402
      %v421 = vunpack.c.l.b16 %v403
      %v422 = vunpack.c.l.b16 %v404
      %v423 = vunpack.c.l.b16 %v405
      %v424 = vunpack.c.l.b16 %v406
      %v425 = vunpack.c.l.b16 %v407
      %v426 = vunpack.c.l.b16 %v408
      %v427 = vpack.c.b16 %v419, %v418
      %v428 = vpack.c.b16 %v421, %v420
      %v429 = vpack.c.b16 %v423, %v422
      %v430 = vpack.c.b16 %v425, %v424
      %v431 = vpack.c.b16 %v426, %v426
      %v437 = vsel %vm273, %v398, 0
      %v440 = vsel %vm277, %v431, 0
      %442 = vmatprep.subr.bf16.mxu0 0
      %443 = vmatpush1.bf16.msra.mxu0 %v427
      %444 = vmatprep.subr.bf16.mxu0 0
      %445 = vmatpush1.bf16.msra.mxu0 %v428
      %446 = vmatprep.subr.bf16.mxu0 0
      %447 = vmatpush1.bf16.msra.mxu0 %v429
      %448 = vmatprep.subr.bf16.mxu0 0
      %449 = vmatpush1.bf16.msra.mxu0 %v430
      %450 = vmatprep.subr.bf16.mxu0 0
      %451 = vmatpush1.bf16.msra.mxu0 %v440
      %452 = vmatprep.subr.bf16.mxu0 0
      %453 = vmatpush1.bf16.msra.mxu0 0
      %454 = vmatprep.subr.bf16.mxu0 0
      %455 = vmatpush1.bf16.msra.mxu0 0
      %456 = vmatprep.subr.bf16.mxu0 0
      %457 = vmatpush1.bf16.msra.mxu0 0
      %458 = vmatprep.subr.bf16.mxu0 0
      %459 = vmatpush1.bf16.msra.mxu0 0
      %460 = vmatprep.subr.bf16.mxu0 0
      %461 = vmatpush1.bf16.msra.mxu0 0
      %462 = vmatprep.subr.bf16.mxu0 0
      %463 = vmatpush1.bf16.msra.mxu0 0
      %464 = vmatprep.subr.bf16.mxu0 0
      %465 = vmatpush1.bf16.msra.mxu0 0
      %466 = vmatprep.subr.bf16.mxu0 0
      %467 = vmatpush1.bf16.msra.mxu0 0
      %468 = vmatprep.subr.bf16.mxu0 0
      %469 = vmatpush1.bf16.msra.mxu0 0
      %470 = vmatprep.subr.bf16.mxu0 0
      %471 = vmatpush1.bf16.msra.mxu0 0
      %472 = vmatprep.subr.bf16.mxu0 0
      %473 = vmatpush1.bf16.msra.mxu0 0
      %474 = vmatprep.mubr.bf16.mxu0 0
      %475 = vmatmul.mubr.bf16.gmra.mrb[0].mxu0 %v437
      %v476 = vpop.f32.mrb[0].mxu0
      %v477 = vadd.f32 0.0, %v476
      %v478 = vpop.f32.mrb[0].mxu0
      %v479 = vpop.f32.mrb[0].mxu0
      %v480 = vadd.f32 0.0, %v479
      %v481 = vpop.f32.mrb[0].mxu0
      %482 = vdwg.mxu0
      %v483 = vadd.f32 %v390, %v477
      %v484 = vadd.f32 %v393, %v480
      %v485 = vld [vmem:[%s2] sm:$0x1]
      %v487 = vlaneseq
      %v488 = vshrl.u32 %v487, 7
      %v489 = vsub.s32 0, %v488
      %v490 = vrot.slane %v485, %v489
      %v492 = vadd.f32 %v483, %v490
      %v493 = vadd.f32 %v484, %v490
      %p494 = scmp.eq.s32.totalorder %s17, 0
      // Predicated region
      $region33: #{resnet_encoder_forward.6} parent=31 // pred_check
        %p495 = pneg %p494
      $region34: #{resnet_encoder_forward.6} parent=31 // pred_check_branch
        %497 = sbr.rel (%p495) target = $region36
      $region35: #{resnet_encoder_forward.6} parent=31 // pred_region
        %498 = vst [vmem:[%s4] sm:$0x1] 0.0
        %499 = vst [vmem:[%s5] sm:$0x1] 0.0
      $region36: #{resnet_encoder_forward.6} parent=31 // pred_fallthru
        _
      %v500 = vld [vmem:[%s4] sm:$0x1]
      %v501 = vadd.f32 %v492, %v493
      %v502 = vrot.slane %v501, 4
      %v503 = vadd.f32 %v501, %v502
      %v504 = vrot.slane %v503, 2
      %v505 = vadd.f32 %v503, %v504
      %v506 = vrot.slane %v505, 1
      %v507 = vadd.f32 %v505, %v506
      %v508 = vadd.f32 %v500, %v507
      %509 = vst [vmem:[%s4] sm:$0x1] %v508
      %v510 = vld [vmem:[%s5] sm:$0x1]
      %v511 = vmul.f32 %v492, %v492
      %v512 = vmul.f32 %v493, %v493
      %v513 = vadd.f32 %v511, %v512
      %v514 = vrot.slane %v513, 4
      %v515 = vadd.f32 %v513, %v514
      %v516 = vrot.slane %v515, 2
      %v517 = vadd.f32 %v515, %v516
      %v518 = vrot.slane %v517, 1
      %v519 = vadd.f32 %v517, %v518
      %v520 = vadd.f32 %v510, %v519
      %521 = vst [vmem:[%s5] sm:$0x1] %v520
      %522 = vst [vmem:[%s219] sm:$0xff] %v492
      %523 = vst [vmem:[%s219 + $0x8] sm:$0xff] %v493
      %p524 = scmp.lt.s32.totalorder %s17, 1
      %s525 = scalar_select %p524, %s17, 1
      %s526 = smul.addr %s525, 2
      %s527 = smul.addr %s526, 8
      %s528 = scalar_lea.vmem %s3, %s527
      // Predicated region
      $region37: #{resnet_encoder_forward.6} parent=31 // pred_check
        %p529 = pneg %p103
      $region38: #{resnet_encoder_forward.6} parent=31 // pred_check_branch
        %531 = sbr.rel (%p529) target = $region40
      $region39: #{resnet_encoder_forward.6} parent=31 // pred_region
        _
      $region40: #{resnet_encoder_forward.6} parent=31 // pred_fallthru
        _
      // Predicated region
      $region41: #{resnet_encoder_forward.6} parent=31 // pred_check
        %p532 = pneg %p124
      $region42: #{resnet_encoder_forward.6} parent=31 // pred_check_branch
        %534 = sbr.rel (%p532) target = $region44
      $region43: #{resnet_encoder_forward.6} parent=31 // pred_region
        _
      $region44: #{resnet_encoder_forward.6} parent=31 // pred_fallthru
        _
      // Predicated region
      $region45: #{resnet_encoder_forward.6} parent=31 // pred_check
        %p535 = pneg %p145
      $region46: #{resnet_encoder_forward.6} parent=31 // pred_check_branch
        %537 = sbr.rel (%p535) target = $region48
      $region47: #{resnet_encoder_forward.6} parent=31 // pred_region
        _
      $region48: #{resnet_encoder_forward.6} parent=31 // pred_fallthru
        _
      // Predicated region
      $region49: #{resnet_encoder_forward.6} parent=31 // pred_check
        %p538 = pneg %p124
      $region50: #{resnet_encoder_forward.6} parent=31 // pred_check_branch
        %540 = sbr.rel (%p538) target = $region52
      $region51: #{resnet_encoder_forward.6} parent=31 // pred_region
        _
      $region52: #{resnet_encoder_forward.6} parent=31 // pred_fallthru
        _
      // Predicated region
      $region53: #{resnet_encoder_forward.6} parent=31 // pred_check
        %p541 = pneg %p145
      $region54: #{resnet_encoder_forward.6} parent=31 // pred_check_branch
        %543 = sbr.rel (%p541) target = $region56
      $region55: #{resnet_encoder_forward.6} parent=31 // pred_region
        _
      $region56: #{resnet_encoder_forward.6} parent=31 // pred_fallthru
        _
    $region32: #{resnet_encoder_forward.6} parent=5 // pred_fallthru
      _
    %p544 = scmp.le.s32.totalorder 2, %s12
    // Predicated region
    $region57: #{resnet_encoder_forward.6} parent=5 // pred_check
      %p545 = pneg %p544
    $region58: #{resnet_encoder_forward.6} parent=5 // pred_check_branch
      %547 = sbr.rel (%p545) target = $region60
    $region59: #{resnet_encoder_forward.6} parent=5 // pred_region
      %s548 = ssub.s32 %s12, 2
      // Predicated region
      $region61: #{resnet_encoder_forward.6} parent=59 // pred_check
        %p549 = pneg %p109
      $region62: #{resnet_encoder_forward.6} parent=59 // pred_check_branch
        %551 = sbr.rel (%p549) target = $region64
      $region63: #{resnet_encoder_forward.6} parent=59 // pred_region
        %p552 = scmp.lt.s32.totalorder %s18, 1
        %s553 = scalar_select %p552, %s18, 1
        %s554 = smul.addr %s553, 2
        %s555 = smul.addr %s554, 8
        %s556 = scalar_lea.vmem %s3, %s555
      $region64: #{resnet_encoder_forward.6} parent=59 // pred_fallthru
        _
    $region60: #{resnet_encoder_forward.6} parent=5 // pred_fallthru
      _
  $region6: #{resnet_encoder_forward.6} parent=0 // loop_footer
    %s16 = sadd.s32 1, %s12
  $region7: #{resnet_encoder_forward.6} parent=0 // loop_footer_branch
    %11 = sbr.rel target = $region3
  $region8: #{resnet_encoder_forward.6} parent=0 // loop_exit
    _

// kernel: resnet_encoder_forward.9
$region0: #{resnet_encoder_forward.9}
  #allocation0 [shape = 'u32[]', space=smem, size = 0x4, offset = 0x4, fixed_abs, tag = 'smem constant byte address 0x4 - core index']
  #allocation1 [shape = 'u32[144,128]{1,0:T(1,128)}', space=vmem, size = 0x12000, scoped, tag = 'internal scratch']
  %s0 = inlined_call_operand.vmem [shape: f32[32,128], index: 0, kind: input, shape index: {}]
  %s1 = inlined_call_operand.vmem [shape: f32[1,128], index: 1, kind: input, shape index: {}]
  %s2 = inlined_call_operand.vmem [shape: f32[1,128], index: 2, kind: input, shape index: {}]
  %s3 = inlined_call_operand.vmem [shape: f32[32,128], index: 3, kind: input, shape index: {}]
  %s4 = inlined_call_operand.vmem [shape: f32[32,128], index: 4, kind: output, shape index: {}]
  %s5 = sld [smem:[#allocation0]]
  $region26: #{resnet_encoder_forward.9} parent=0
    _
  %s7 = ssub.s32 1, %s5
  %s8 = scalar_select 0, %s7, %s5
  // Predicated region
  $region2: #{resnet_encoder_forward.9} parent=0 // pred_check
    _
  $region3: #{resnet_encoder_forward.9} parent=0 // pred_check_branch
    %10 = sbr.rel (0) target = $region5
  $region4: #{resnet_encoder_forward.9} parent=0 // pred_region
    _
  $region5: #{resnet_encoder_forward.9} parent=0 // pred_fallthru
    _
  // Predicated region
  $region6: #{resnet_encoder_forward.9} parent=0 // pred_check
    _
  $region7: #{resnet_encoder_forward.9} parent=0 // pred_check_branch
    %12 = sbr.rel (0) target = $region9
  $region8: #{resnet_encoder_forward.9} parent=0 // pred_region
    _
  $region9: #{resnet_encoder_forward.9} parent=0 // pred_fallthru
    _
  // Predicated region
  $region10: #{resnet_encoder_forward.9} parent=0 // pred_check
    _
  $region11: #{resnet_encoder_forward.9} parent=0 // pred_check_branch
    %14 = sbr.rel (0) target = $region13
  $region12: #{resnet_encoder_forward.9} parent=0 // pred_region
    _
  $region13: #{resnet_encoder_forward.9} parent=0 // pred_fallthru
    _
  // Predicated region
  $region14: #{resnet_encoder_forward.9} parent=0 // pred_check
    _
  $region15: #{resnet_encoder_forward.9} parent=0 // pred_check_branch
    %16 = sbr.rel (0) target = $region17
  $region16: #{resnet_encoder_forward.9} parent=0 // pred_region
    _
  $region17: #{resnet_encoder_forward.9} parent=0 // pred_fallthru
    _
  %v17 = vld [vmem:[%s0] sm:$0xff]
  %v18 = vld [vmem:[%s0 + $0x8] sm:$0xff]
  %v19 = vld [vmem:[%s0 + $0x10] sm:$0xff]
  %v20 = vld [vmem:[%s0 + $0x18] sm:$0xff]
  %v21 = vld [vmem:[%s1] sm:$0x1]
  %v23 = vlaneseq
  %v24 = vshrl.u32 %v23, 7
  %v25 = vsub.s32 0, %v24
  %v26 = vrot.slane %v21, %v25
  %v28 = vmul.f32 %v17, %v26
  %v29 = vmul.f32 %v18, %v26
  %v30 = vmul.f32 %v19, %v26
  %v31 = vmul.f32 %v20, %v26
  %v32 = vld [vmem:[%s2] sm:$0x1]
  %v34 = vlaneseq
  %v35 = vshrl.u32 %v34, 7
  %v36 = vsub.s32 0, %v35
  %v37 = vrot.slane %v32, %v36
  %v39 = vadd.f32 %v28, %v37
  %v40 = vadd.f32 %v29, %v37
  %v41 = vadd.f32 %v30, %v37
  %v42 = vadd.f32 %v31, %v37
  %v43 = vld [vmem:[%s3] sm:$0xff]
  %v44 = vld [vmem:[%s3 + $0x8] sm:$0xff]
  %v45 = vld [vmem:[%s3 + $0x10] sm:$0xff]
  %v46 = vld [vmem:[%s3 + $0x18] sm:$0xff]
  %v47 = vadd.f32 %v39, %v43
  %v48 = vadd.f32 %v40, %v44
  %v49 = vadd.f32 %v41, %v45
  %v50 = vadd.f32 %v42, %v46
  %v51 = vmax.f32 %v47, 0.0
  %v52 = vmax.f32 %v48, 0.0
  %v53 = vmax.f32 %v49, 0.0
  %v54 = vmax.f32 %v50, 0.0
  %55 = vst [vmem:[%s4] sm:$0xff] %v51
  %56 = vst [vmem:[%s4 + $0x8] sm:$0xff] %v52
  %57 = vst [vmem:[%s4 + $0x10] sm:$0xff] %v53
  %58 = vst [vmem:[%s4 + $0x18] sm:$0xff] %v54
  // Predicated region
  $region18: #{resnet_encoder_forward.9} parent=0 // pred_check
    _
  $region19: #{resnet_encoder_forward.9} parent=0 // pred_check_branch
    %60 = sbr.rel (0) target = $region21
  $region20: #{resnet_encoder_forward.9} parent=0 // pred_region
    _
  $region21: #{resnet_encoder_forward.9} parent=0 // pred_fallthru
    _
  // Predicated region
  $region22: #{resnet_encoder_forward.9} parent=0 // pred_check
    _
  $region23: #{resnet_encoder_forward.9} parent=0 // pred_check_branch
    %62 = sbr.rel (0) target = $region25
  $region24: #{resnet_encoder_forward.9} parent=0 // pred_region
    _
  $region25: #{resnet_encoder_forward.9} parent=0 // pred_fallthru
    _

// kernel: resnet_encoder_forward.8
$region0: #{resnet_encoder_forward.8}
  #allocation0 [shape = 'u32[]', space=smem, size = 0x4, offset = 0x4, fixed_abs, tag = 'smem constant byte address 0x4 - core index']
  #allocation1 [shape = 'u32[144,128]{1,0:T(1,128)}', space=vmem, size = 0x12000, scoped, tag = 'internal scratch']
  %s0 = inlined_call_operand.vmem [shape: f32[2,18,144], index: 0, kind: input, shape index: {}]
  %s1 = inlined_call_operand.vmem [shape: bf16[3,144,128], index: 1, kind: input, shape index: {}]
  %s2 = inlined_call_operand.vmem [shape: f32[1,128], index: 2, kind: input, shape index: {}]
  %s3 = inlined_call_operand.vmem [shape: f32[2,16,128], index: 3, kind: output, shape index: {0}]
  %s4 = inlined_call_operand.vmem [shape: f32[1,128], index: 4, kind: output, shape index: {1}]
  %s5 = inlined_call_operand.vmem [shape: f32[1,128], index: 5, kind: output, shape index: {2}]
  %6 = xla_tuple %s3, %s4, %s5
  %s7 = sld [smem:[#allocation0]]
  $region65: #{resnet_encoder_forward.8} parent=0
    _
  %s9 = ssub.s32 1, %s7
  %s10 = scalar_select 0, %s9, %s7
  loop: start=0, step=1, limit=4
  $region2: #{resnet_encoder_forward.8} parent=0 // loop_pre_header
    _
  $region3: #{resnet_encoder_forward.8} parent=0 // loop_header
    %s12 = sphi 0, %s16
    %p13 = scmp.ge.s32.totalorder %s12, 4
    %s22 = sphi 0, %s24
    %s25 = sphi 0, %s22
    %s26 = sphi 0, %s25
    %s42 = sphi 0, %s26
    %s46 = sphi 0, %s46
    %s48 = sphi 0, %s46
    %s49 = sphi 0, %s48
    %s63 = sphi 0, %s49
    %s67 = sphi 0, %s67
    %s69 = sphi 0, %s67
    %s70 = sphi 0, %s69
    %s84 = sphi 0, %s70
    %s90 = sphi 0, %s92
    %s93 = sphi 0, %s90
    %s94 = sphi 0, %s93
    %s110 = sphi 0, %s94
    %s114 = sphi 0, %s114
    %s116 = sphi 0, %s114
    %s117 = sphi 0, %s116
    %s131 = sphi 0, %s117
    %s135 = sphi 0, %s135
    %s137 = sphi 0, %s135
    %s138 = sphi 0, %s137
    %s152 = sphi 0, %s138
  $region4: #{resnet_encoder_forward.8} parent=0 // loop_header_branch
    %15 = sbr.rel (%p13) target = $region8
  $region5: #{resnet_encoder_forward.8} parent=0 // loop_body
    %s17 = ssub.s32 %s12, 1
    %s18 = ssub.s32 %s12, 2
    %s19 = sadd.s32 %s12, 1
    %s20 = ssub.s32 %s12, %s19
    %p21 = scmp.eq.s32.totalorder %s20, 0
    %s23 = sadd.s32 %s22, 1
    %s24 = scalar_select %p21, %s22, %s23
    %p27 = pneg %p21
    %p28 = scmp.eq.s32.totalorder %s12, 1
    %p29 = por %p27, %p28
    %p30 = scmp.ne.s32.totalorder %s22, %s25
    %p31 = scmp.eq.s32.totalorder %s12, 0
    %p32 = por %p30, %p31
    %p33 = scmp.ne.s32.totalorder %s22, %s25
    %p34 = scmp.eq.s32.totalorder %s17, 1
    %p35 = por %p33, %p34
    %p36 = scmp.ne.s32.totalorder %s25, %s26
    %p37 = scmp.eq.s32.totalorder %s17, 0
    %p38 = por %p36, %p37
    %p39 = scmp.ne.s32.totalorder %s25, %s26
    %p40 = scmp.eq.s32.totalorder %s18, 1
    %p41 = por %p39, %p40
    %p43 = scmp.ne.s32.totalorder %s26, %s42
    %p44 = scmp.eq.s32.totalorder %s18, 0
    %p45 = por %p43, %p44
    %s47 = sadd.s32 %s46, 1
    %p50 = scmp.eq.s32.totalorder %s12, 1
    %p51 = scmp.ne.s32.totalorder %s46, %s48
    %p52 = scmp.eq.s32.totalorder %s12, 0
    %p53 = por %p51, %p52
    %p54 = scmp.ne.s32.totalorder %s46, %s48
    %p55 = scmp.eq.s32.totalorder %s17, 1
    %p56 = por %p54, %p55
    %p57 = scmp.ne.s32.totalorder %s48, %s49
    %p58 = scmp.eq.s32.totalorder %s17, 0
    %p59 = por %p57, %p58
    %p60 = scmp.ne.s32.totalorder %s48, %s49
    %p61 = scmp.eq.s32.totalorder %s18, 1
    %p62 = por %p60, %p61
    %p64 = scmp.ne.s32.totalorder %s49, %s63
    %p65 = scmp.eq.s32.totalorder %s18, 0
    %p66 = por %p64, %p65
    %s68 = sadd.s32 %s67, 1
    %p71 = scmp.eq.s32.totalorder %s12, 1
    %p72 = scmp.ne.s32.totalorder %s67, %s69
    %p73 = scmp.eq.s32.totalorder %s12, 0
    %p74 = por %p72, %p73
    %p75 = scmp.ne.s32.totalorder %s67, %s69
    %p76 = scmp.eq.s32.totalorder %s17, 1
    %p77 = por %p75, %p76
    %p78 = scmp.ne.s32.totalorder %s69, %s70
    %p79 = scmp.eq.s32.totalorder %s17, 0
    %p80 = por %p78, %p79
    %p81 = scmp.ne.s32.totalorder %s69, %s70
    %p82 = scmp.eq.s32.totalorder %s18, 1
    %p83 = por %p81, %p82
    %p85 = scmp.ne.s32.totalorder %s70, %s84
    %p86 = scmp.eq.s32.totalorder %s18, 0
    %p87 = por %p85, %p86
    %s88 = ssub.s32 %s12, %s19
    %p89 = scmp.eq.s32.totalorder %s88, 0
    %s91 = sadd.s32 %s90, 1
    %s92 = scalar_select %p89, %s90, %s91
    %p95 = pneg %p89
    %p96 = scmp.eq.s32.totalorder %s12, 1
    %p97 = por %p95, %p96
    %p98 = scmp.ne.s32.totalorder %s90, %s93
    %p99 = scmp.eq.s32.totalorder %s12, 0
    %p100 = por %p98, %p99
    %p101 = scmp.ne.s32.totalorder %s90, %s93
    %p102 = scmp.eq.s32.totalorder %s17, 1
    %p103 = por %p101, %p102
    %p104 = scmp.ne.s32.totalorder %s93, %s94
    %p105 = scmp.eq.s32.totalorder %s17, 0
    %p106 = por %p104, %p105
    %p107 = scmp.ne.s32.totalorder %s93, %s94
    %p108 = scmp.eq.s32.totalorder %s18, 1
    %p109 = por %p107, %p108
    %p111 = scmp.ne.s32.totalorder %s94, %s110
    %p112 = scmp.eq.s32.totalorder %s18, 0
    %p113 = por %p111, %p112
    %s115 = sadd.s32 %s114, 1
    %p118 = scmp.eq.s32.totalorder %s12, 1
    %p119 = scmp.ne.s32.totalorder %s114, %s116
    %p120 = scmp.eq.s32.totalorder %s12, 0
    %p121 = por %p119, %p120
    %p122 = scmp.ne.s32.totalorder %s114, %s116
    %p123 = scmp.eq.s32.totalorder %s17, 1
    %p124 = por %p122, %p123
    %p125 = scmp.ne.s32.totalorder %s116, %s117
    %p126 = scmp.eq.s32.totalorder %s17, 0
    %p127 = por %p125, %p126
    %p128 = scmp.ne.s32.totalorder %s116, %s117
    %p129 = scmp.eq.s32.totalorder %s18, 1
    %p130 = por %p128, %p129
    %p132 = scmp.ne.s32.totalorder %s117, %s131
    %p133 = scmp.eq.s32.totalorder %s18, 0
    %p134 = por %p132, %p133
    %s136 = sadd.s32 %s135, 1
    %p139 = scmp.eq.s32.totalorder %s12, 1
    %p140 = scmp.ne.s32.totalorder %s135, %s137
    %p141 = scmp.eq.s32.totalorder %s12, 0
    %p142 = por %p140, %p141
    %p143 = scmp.ne.s32.totalorder %s135, %s137
    %p144 = scmp.eq.s32.totalorder %s17, 1
    %p145 = por %p143, %p144
    %p146 = scmp.ne.s32.totalorder %s137, %s138
    %p147 = scmp.eq.s32.totalorder %s17, 0
    %p148 = por %p146, %p147
    %p149 = scmp.ne.s32.totalorder %s137, %s138
    %p150 = scmp.eq.s32.totalorder %s18, 1
    %p151 = por %p149, %p150
    %p153 = scmp.ne.s32.totalorder %s138, %s152
    %p154 = scmp.eq.s32.totalorder %s18, 0
    %p155 = por %p153, %p154
    %p156 = scmp.le.s32.totalorder 1, %s12
    %p157 = scmp.lt.s32.totalorder %s12, 3
    %p158 = pnand %p156, %p157
    %p159 = pneg %p158
    // Predicated region
    $region9: #{resnet_encoder_forward.8} parent=5 // pred_check
      _
    $region10: #{resnet_encoder_forward.8} parent=5 // pred_check_branch
      %161 = sbr.rel (%p158) target = $region12
    $region11: #{resnet_encoder_forward.8} parent=5 // pred_region
      %s162 = ssub.s32 %s12, 1
      // Predicated region
      $region13: #{resnet_encoder_forward.8} parent=11 // pred_check
        %p163 = pneg %p59
      $region14: #{resnet_encoder_forward.8} parent=11 // pred_check_branch
        %165 = sbr.rel (%p163) target = $region16
      $region15: #{resnet_encoder_forward.8} parent=11 // pred_region
        _
      $region16: #{resnet_encoder_forward.8} parent=11 // pred_fallthru
        _
      // Predicated region
      $region17: #{resnet_encoder_forward.8} parent=11 // pred_check
        %p166 = pneg %p80
      $region18: #{resnet_encoder_forward.8} parent=11 // pred_check_branch
        %168 = sbr.rel (%p166) target = $region20
      $region19: #{resnet_encoder_forward.8} parent=11 // pred_region
        _
      $region20: #{resnet_encoder_forward.8} parent=11 // pred_fallthru
        _
    $region12: #{resnet_encoder_forward.8} parent=5 // pred_fallthru
      _
    %p169 = scmp.lt.s32.totalorder %s12, 2
    // Predicated region
    $region21: #{resnet_encoder_forward.8} parent=5 // pred_check
      %p170 = pneg %p169
    $region22: #{resnet_encoder_forward.8} parent=5 // pred_check_branch
      %172 = sbr.rel (%p170) target = $region24
    $region23: #{resnet_encoder_forward.8} parent=5 // pred_region
      // Predicated region
      $region25: #{resnet_encoder_forward.8} parent=23 // pred_check
        %p173 = pneg %p32
      $region26: #{resnet_encoder_forward.8} parent=23 // pred_check_branch
        %175 = sbr.rel (%p173) target = $region28
      $region27: #{resnet_encoder_forward.8} parent=23 // pred_region
        %p176 = scmp.lt.s32.totalorder %s12, 1
        %s177 = scalar_select %p176, %s12, 1
        %s178 = smul.addr %s177, 6
        %s179 = smul.addr %s178, 8
        %s180 = scalar_lea.vmem %s0, %s179
      $region28: #{resnet_encoder_forward.8} parent=23 // pred_fallthru
        _
    $region24: #{resnet_encoder_forward.8} parent=5 // pred_fallthru
      _
    %p181 = scmp.le.s32.totalorder 1, %s12
    %p182 = scmp.lt.s32.totalorder %s12, 3
    %p183 = pnand %p181, %p182
    %p184 = pneg %p183
    // Predicated region
    $region29: #{resnet_encoder_forward.8} parent=5 // pred_check
      _
    $region30: #{resnet_encoder_forward.8} parent=5 // pred_check_branch
      %186 = sbr.rel (%p183) target = $region32
    $region31: #{resnet_encoder_forward.8} parent=5 // pred_region
      %s187 = ssub.s32 %s12, 1
      %p188 = scmp.lt.s32.totalorder %s17, 1
      %s189 = scalar_select %p188, %s17, 1
      %s190 = smul.addr %s189, 6
      %s191 = smul.addr %s190, 8
      %s192 = scalar_lea.vmem %s0, %s191
      %p193 = pneg %p38
      %p194 = pneg %p35
      %p195 = pneg %p59
      %p196 = pneg %p56
      %p197 = pneg %p80
      %p198 = pneg %p77
      %p199 = pneg %p106
      %p200 = pneg %p103
      %p201 = scmp.lt.s32.totalorder %s17, 1
      %s202 = scalar_select %p201, %s17, 1
      %s203 = smul.addr %s202, 2
      %s204 = smul.addr %s203, 8
      %s205 = scalar_lea.vmem %s3, %s204
      %p206 = pneg %p127
      %p207 = pneg %p124
      %p208 = pneg %p148
      %p209 = pneg %p145
      %p210 = scmp.lt.s32.totalorder %s17, 1
      %s211 = scalar_select %p210, %s17, 1
      %s212 = smul.addr %s211, 6
      %s213 = smul.addr %s212, 8
      %s214 = scalar_lea.vmem %s0, %s213
      %p215 = scmp.lt.s32.totalorder %s17, 1
      %s216 = scalar_select %p215, %s17, 1
      %s217 = smul.addr %s216, 2
      %s218 = smul.addr %s217, 8
      %s219 = scalar_lea.vmem %s3, %s218
      %v221 = vld [vmem:[%s214] sm:$0xff]
      %v222 = vld [vmem:[%s214 + $0x8] sm:$0xff]
      %v223 = vld [vmem:[%s214 + $0x10] sm:$0xff]
      %v224 = vld [vmem:[%s214 + $0x18] sm:$0xff]
      %v225 = vpack.c.bf16 %v223, %v221
      %v226 = vpack.c.bf16 %v224, %v222
      %v227 = vld [vmem:[%s1] sm:$0xf]
      %v228 = vld [vmem:[%s1 + $0x4] sm:$0xf]
      %v229 = vld [vmem:[%s1 + $0x8] sm:$0xf]
      %v230 = vld [vmem:[%s1 + $0xc] sm:$0xf]
      %v231 = vld [vmem:[%s1 + $0x10] sm:$0xf]
      %v232 = vld [vmem:[%s1 + $0x14] sm:$0xf]
      %v233 = vld [vmem:[%s1 + $0x18] sm:$0xf]
      %v234 = vld [vmem:[%s1 + $0x1c] sm:$0xf]
      %v235 = vld [vmem:[%s1 + $0x20] sm:$0xf]
      %v236 = vld [vmem:[%s1 + $0x24] sm:$0xf]
      %v237 = vld [vmem:[%s1 + $0x28] sm:$0xf]
      %v238 = vld [vmem:[%s1 + $0x2c] sm:$0xf]
      %v239 = vld [vmem:[%s1 + $0x30] sm:$0xf]
      %v240 = vld [vmem:[%s1 + $0x34] sm:$0xf]
      %v241 = vld [vmem:[%s1 + $0x38] sm:$0xf]
      %v242 = vld [vmem:[%s1 + $0x3c] sm:$0xf]
      %v243 = vld [vmem:[%s1 + $0x40] sm:$0xf]
      %v244 = vld [vmem:[%s1 + $0x44] sm:$0xf]
      %v245 = vld [vmem:[%s214] sm:$0xfe]
      %v246 = vld [vmem:[%s214 + $0x8] sm:$0xfe]
      %v247 = vld [vmem:[%s214 + $0x20] sm:$0x1]
      %v248 = vld [vmem:[%s214 + $0x28] sm:$0x1]
      %v249 = vpack.c.bf16 %v223, %v245
      %v250 = vpack.c.bf16 %v224, %v246
      %v251 = vpack.c.bf16 %v247, %v247
      %v252 = vpack.c.bf16 %v248, %v248
      %s253 = scalar_lea.vmem %s1, 72
      %v254 = vld [vmem:[%s253] sm:$0xf]
      %v255 = vld [vmem:[%s253 + $0x4] sm:$0xf]
      %v256 = vld [vmem:[%s253 + $0x8] sm:$0xf]
      %v257 = vld [vmem:[%s253 + $0xc] sm:$0xf]
      %v258 = vld [vmem:[%s253 + $0x10] sm:$0xf]
      %v259 = vld [vmem:[%s253 + $0x14] sm:$0xf]
      %v260 = vld [vmem:[%s253 + $0x18] sm:$0xf]
      %v261 = vld [vmem:[%s253 + $0x1c] sm:$0xf]
      %v262 = vld [vmem:[%s253 + $0x20] sm:$0xf]
      %v263 = vld [vmem:[%s253 + $0x24] sm:$0xf]
      %v264 = vld [vmem:[%s253 + $0x28] sm:$0xf]
      %v265 = vld [vmem:[%s253 + $0x2c] sm:$0xf]
      %v266 = vld [vmem:[%s253 + $0x30] sm:$0xf]
      %v267 = vld [vmem:[%s253 + $0x34] sm:$0xf]
      %v268 = vld [vmem:[%s253 + $0x38] sm:$0xf]
      %v269 = vld [vmem:[%s253 + $0x3c] sm:$0xf]
      %v270 = vld [vmem:[%s253 + $0x40] sm:$0xf]
      %v271 = vld [vmem:[%s253 + $0x44] sm:$0xf]
      %vm272 = vsmask.f32 7424
      %v274 = vshrl.u32 %v249, 16
      %v276 = vshll.u32 %v249, 16
      %v278 = vrot.slane %v276, 1
      %v279 = vor.u32 %v274, %v278
      %v281 = vshll.u32 %v251, 16
      %v283 = vrot.slane %v281, 1
      %v284 = vsel %vm272, %v279, %v283
      %v286 = vshrl.u32 %v250, 16
      %v288 = vshll.u32 %v250, 16
      %v290 = vrot.slane %v288, 1
      %v291 = vor.u32 %v286, %v290
      %v293 = vshll.u32 %v252, 16
      %v295 = vrot.slane %v293, 1
      %v296 = vsel %vm272, %v291, %v295
      %v316 = vunpack.c.l.b16 %v254
      %v317 = vunpack.c.l.b16 %v255
      %v318 = vunpack.c.l.b16 %v256
      %v319 = vunpack.c.l.b16 %v257
      %v320 = vunpack.c.l.b16 %v258
      %v321 = vunpack.c.l.b16 %v259
      %v322 = vunpack.c.l.b16 %v260
      %v323 = vunpack.c.l.b16 %v261
      %v324 = vunpack.c.l.b16 %v262
      %v325 = vunpack.c.l.b16 %v263
      %v326 = vunpack.c.l.b16 %v264
      %v327 = vunpack.c.l.b16 %v265
      %v328 = vunpack.c.l.b16 %v266
      %v329 = vunpack.c.l.b16 %v267
      %v330 = vunpack.c.l.b16 %v268
      %v331 = vunpack.c.l.b16 %v269
      %v332 = vunpack.c.l.b16 %v270
      %v333 = vunpack.c.l.b16 %v271
      %v334 = vpack.c.b16 %v317, %v316
      %v335 = vpack.c.b16 %v319, %v318
      %v336 = vpack.c.b16 %v321, %v320
      %v337 = vpack.c.b16 %v323, %v322
      %v338 = vpack.c.b16 %v325, %v324
      %v339 = vpack.c.b16 %v327, %v326
      %v340 = vpack.c.b16 %v329, %v328
      %v341 = vpack.c.b16 %v331, %v330
      %v342 = vpack.c.b16 %v333, %v332
      %vm352 = vcmask 130048
      %v354 = vsel %vm352, %v296, 0
      %356 = vmatprep.subr.bf16.mxu0 0
      %357 = vmatpush1.bf16.msra.mxu0 %v334
      %358 = vmatprep.subr.bf16.mxu0 0
      %359 = vmatpush1.bf16.msra.mxu0 %v335
      %360 = vmatprep.subr.bf16.mxu0 0
      %361 = vmatpush1.bf16.msra.mxu0 %v336
      %362 = vmatprep.subr.bf16.mxu0 0
      %363 = vmatpush1.bf16.msra.mxu0 %v337
      %364 = vmatprep.subr.bf16.mxu0 0
      %365 = vmatpush1.bf16.msra.mxu0 %v338
      %366 = vmatprep.subr.bf16.mxu0 0
      %367 = vmatpush1.bf16.msra.mxu0 %v339
      %368 = vmatprep.subr.bf16.mxu0 0
      %369 = vmatpush1.bf16.msra.mxu0 %v340
      %370 = vmatprep.subr.bf16.mxu0 0
      %371 = vmatpush1.bf16.msra.mxu0 %v341
      %372 = vmatprep.subr.bf16.mxu0 0
      %373 = vmatpush1.bf16.msra.mxu0 %v342
      %374 = vmatprep.subr.bf16.mxu0 0
      %375 = vmatpush1.bf16.msra.mxu0 0
      %376 = vmatprep.subr.bf16.mxu0 0
      %377 = vmatpush1.bf16.msra.mxu0 0
      %378 = vmatprep.subr.bf16.mxu0 0
      %379 = vmatpush1.bf16.msra.mxu0 0
      %380 = vmatprep.subr.bf16.mxu0 0
      %381 = vmatpush1.bf16.msra.mxu0 0
      %382 = vmatprep.subr.bf16.mxu0 0
      %383 = vmatpush1.bf16.msra.mxu0 0
      %384 = vmatprep.subr.bf16.mxu0 0
      %385 = vmatpush1.bf16.msra.mxu0 0
      %386 = vmatprep.subr.bf16.mxu0 0
      %387 = vmatpush1.bf16.msra.mxu0 0
      %388 = vmatprep.mubr.bf16.mxu0 %v354
      %389 = vmatmul.mubr.bf16.gmra.mrb[0].mxu0 %v284
      %v390 = vpop.f32.mrb[0].mxu0
      %v391 = vadd.f32 0.0, %v390
      %v392 = vpop.f32.mrb[0].mxu0
      %v393 = vpop.f32.mrb[0].mxu0
      %v394 = vadd.f32 0.0, %v393
      %v395 = vpop.f32.mrb[0].mxu0
      %396 = vdwg.mxu0
      %v415 = vunpack.c.l.b16 %v227
      %v416 = vunpack.c.l.b16 %v228
      %v417 = vunpack.c.l.b16 %v229
      %v418 = vunpack.c.l.b16 %v230
      %v419 = vunpack.c.l.b16 %v231
      %v420 = vunpack.c.l.b16 %v232
      %v421 = vunpack.c.l.b16 %v233
      %v422 = vunpack.c.l.b16 %v234
      %v423 = vunpack.c.l.b16 %v235
      %v424 = vunpack.c.l.b16 %v236
      %v425 = vunpack.c.l.b16 %v237
      %v426 = vunpack.c.l.b16 %v238
      %v427 = vunpack.c.l.b16 %v239
      %v428 = vunpack.c.l.b16 %v240
      %v429 = vunpack.c.l.b16 %v241
      %v430 = vunpack.c.l.b16 %v242
      %v431 = vunpack.c.l.b16 %v243
      %v432 = vunpack.c.l.b16 %v244
      %v433 = vpack.c.b16 %v416, %v415
      %v434 = vpack.c.b16 %v418, %v417
      %v435 = vpack.c.b16 %v420, %v419
      %v436 = vpack.c.b16 %v422, %v421
      %v437 = vpack.c.b16 %v424, %v423
      %v438 = vpack.c.b16 %v426, %v425
      %v439 = vpack.c.b16 %v428, %v427
      %v440 = vpack.c.b16 %v430, %v429
      %v441 = vpack.c.b16 %v432, %v431
      %v452 = vsel %vm352, %v226, 0
      %454 = vmatprep.subr.bf16.mxu0 0
      %455 = vmatpush1.bf16.msra.mxu0 %v433
      %456 = vmatprep.subr.bf16.mxu0 0
      %457 = vmatpush1.bf16.msra.mxu0 %v434
      %458 = vmatprep.subr.bf16.mxu0 0
      %459 = vmatpush1.bf16.msra.mxu0 %v435
      %460 = vmatprep.subr.bf16.mxu0 0
      %461 = vmatpush1.bf16.msra.mxu0 %v436
      %462 = vmatprep.subr.bf16.mxu0 0
      %463 = vmatpush1.bf16.msra.mxu0 %v437
      %464 = vmatprep.subr.bf16.mxu0 0
      %465 = vmatpush1.bf16.msra.mxu0 %v438
      %466 = vmatprep.subr.bf16.mxu0 0
      %467 = vmatpush1.bf16.msra.mxu0 %v439
      %468 = vmatprep.subr.bf16.mxu0 0
      %469 = vmatpush1.bf16.msra.mxu0 %v440
      %470 = vmatprep.subr.bf16.mxu0 0
      %471 = vmatpush1.bf16.msra.mxu0 %v441
      %472 = vmatprep.subr.bf16.mxu0 0
      %473 = vmatpush1.bf16.msra.mxu0 0
      %474 = vmatprep.subr.bf16.mxu0 0
      %475 = vmatpush1.bf16.msra.mxu0 0
      %476 = vmatprep.subr.bf16.mxu0 0
      %477 = vmatpush1.bf16.msra.mxu0 0
      %478 = vmatprep.subr.bf16.mxu0 0
      %479 = vmatpush1.bf16.msra.mxu0 0
      %480 = vmatprep.subr.bf16.mxu0 0
      %481 = vmatpush1.bf16.msra.mxu0 0
      %482 = vmatprep.subr.bf16.mxu0 0
      %483 = vmatpush1.bf16.msra.mxu0 0
      %484 = vmatprep.subr.bf16.mxu0 0
      %485 = vmatpush1.bf16.msra.mxu0 0
      %486 = vmatprep.mubr.bf16.mxu0 %v452
      %487 = vmatmul.mubr.bf16.gmra.mrb[0].mxu0 %v225
      %v488 = vpop.f32.mrb[0].mxu0
      %v489 = vadd.f32 %v391, %v488
      %v490 = vpop.f32.mrb[0].mxu0
      %v491 = vpop.f32.mrb[0].mxu0
      %v492 = vadd.f32 %v394, %v491
      %v493 = vpop.f32.mrb[0].mxu0
      %494 = vdwg.mxu0
      %v495 = vld [vmem:[%s214] sm:$0xfc]
      %v496 = vld [vmem:[%s214 + $0x8] sm:$0xfc]
      %v497 = vld [vmem:[%s214 + $0x20] sm:$0x3]
      %v498 = vld [vmem:[%s214 + $0x28] sm:$0x3]
      %v499 = vpack.c.bf16 %v223, %v495
      %v500 = vpack.c.bf16 %v224, %v496
      %v501 = vpack.c.bf16 %v497, %v497
      %v502 = vpack.c.bf16 %v498, %v498
      %s503 = scalar_lea.vmem %s1, 144
      %v504 = vld [vmem:[%s503] sm:$0xf]
      %v505 = vld [vmem:[%s503 + $0x4] sm:$0xf]
      %v506 = vld [vmem:[%s503 + $0x8] sm:$0xf]
      %v507 = vld [vmem:[%s503 + $0xc] sm:$0xf]
      %v508 = vld [vmem:[%s503 + $0x10] sm:$0xf]
      %v509 = vld [vmem:[%s503 + $0x14] sm:$0xf]
      %v510 = vld [vmem:[%s503 + $0x18] sm:$0xf]
      %v511 = vld [vmem:[%s503 + $0x1c] sm:$0xf]
      %v512 = vld [vmem:[%s503 + $0x20] sm:$0xf]
      %v513 = vld [vmem:[%s503 + $0x24] sm:$0xf]
      %v514 = vld [vmem:[%s503 + $0x28] sm:$0xf]
      %v515 = vld [vmem:[%s503 + $0x2c] sm:$0xf]
      %v516 = vld [vmem:[%s503 + $0x30] sm:$0xf]
      %v517 = vld [vmem:[%s503 + $0x34] sm:$0xf]
      %v518 = vld [vmem:[%s503 + $0x38] sm:$0xf]
      %v519 = vld [vmem:[%s503 + $0x3c] sm:$0xf]
      %v520 = vld [vmem:[%s503 + $0x40] sm:$0xf]
      %v521 = vld [vmem:[%s503 + $0x44] sm:$0xf]
      %vm526 = vcmask 1046528
      %v527 = vrot.slane %v499, 1
      %v528 = vrot.slane %v501, 1
      %v529 = vsel %vm526, %v527, %v528
      %v530 = vrot.slane %v500, 1
      %v531 = vrot.slane %v502, 1
      %v532 = vsel %vm526, %v530, %v531
      %v552 = vunpack.c.l.b16 %v504
      %v553 = vunpack.c.l.b16 %v505
      %v554 = vunpack.c.l.b16 %v506
      %v555 = vunpack.c.l.b16 %v507
      %v556 = vunpack.c.l.b16 %v508
      %v557 = vunpack.c.l.b16 %v509
      %v558 = vunpack.c.l.b16 %v510
      %v559 = vunpack.c.l.b16 %v511
      %v560 = vunpack.c.l.b16 %v512
      %v561 = vunpack.c.l.b16 %v513
      %v562 = vunpack.c.l.b16 %v514
      %v563 = vunpack.c.l.b16 %v515
      %v564 = vunpack.c.l.b16 %v516
      %v565 = vunpack.c.l.b16 %v517
      %v566 = vunpack.c.l.b16 %v518
      %v567 = vunpack.c.l.b16 %v519
      %v568 = vunpack.c.l.b16 %v520
      %v569 = vunpack.c.l.b16 %v521
      %v570 = vpack.c.b16 %v553, %v552
      %v571 = vpack.c.b16 %v555, %v554
      %v572 = vpack.c.b16 %v557, %v556
      %v573 = vpack.c.b16 %v559, %v558
      %v574 = vpack.c.b16 %v561, %v560
      %v575 = vpack.c.b16 %v563, %v562
      %v576 = vpack.c.b16 %v565, %v564
      %v577 = vpack.c.b16 %v567, %v566
      %v578 = vpack.c.b16 %v569, %v568
      %v589 = vsel %vm352, %v532, 0
      %591 = vmatprep.subr.bf16.mxu0 0
      %592 = vmatpush1.bf16.msra.mxu0 %v570
      %593 = vmatprep.subr.bf16.mxu0 0
      %594 = vmatpush1.bf16.msra.mxu0 %v571
      %595 = vmatprep.subr.bf16.mxu0 0
      %596 = vmatpush1.bf16.msra.mxu0 %v572
      %597 = vmatprep.subr.bf16.mxu0 0
      %598 = vmatpush1.bf16.msra.mxu0 %v573
      %599 = vmatprep.subr.bf16.mxu0 0
      %600 = vmatpush1.bf16.msra.mxu0 %v574
      %601 = vmatprep.subr.bf16.mxu0 0
      %602 = vmatpush1.bf16.msra.mxu0 %v575
      %603 = vmatprep.subr.bf16.mxu0 0
      %604 = vmatpush1.bf16.msra.mxu0 %v576
      %605 = vmatprep.subr.bf16.mxu0 0
      %606 = vmatpush1.bf16.msra.mxu0 %v577
      %607 = vmatprep.subr.bf16.mxu0 0
      %608 = vmatpush1.bf16.msra.mxu0 %v578
      %609 = vmatprep.subr.bf16.mxu0 0
      %610 = vmatpush1.bf16.msra.mxu0 0
      %611 = vmatprep.subr.bf16.mxu0 0
      %612 = vmatpush1.bf16.msra.mxu0 0
      %613 = vmatprep.subr.bf16.mxu0 0
      %614 = vmatpush1.bf16.msra.mxu0 0
      %615 = vmatprep.subr.bf16.mxu0 0
      %616 = vmatpush1.bf16.msra.mxu0 0
      %617 = vmatprep.subr.bf16.mxu0 0
      %618 = vmatpush1.bf16.msra.mxu0 0
      %619 = vmatprep.subr.bf16.mxu0 0
      %620 = vmatpush1.bf16.msra.mxu0 0
      %621 = vmatprep.subr.bf16.mxu0 0
      %622 = vmatpush1.bf16.msra.mxu0 0
      %623 = vmatprep.mubr.bf16.mxu0 %v589
      %624 = vmatmul.mubr.bf16.gmra.mrb[0].mxu0 %v529
      %v625 = vpop.f32.mrb[0].mxu0
      %v626 = vadd.f32 0.0, %v625
      %v627 = vpop.f32.mrb[0].mxu0
      %v628 = vpop.f32.mrb[0].mxu0
      %v629 = vadd.f32 0.0, %v628
      %v630 = vpop.f32.mrb[0].mxu0
      %631 = vdwg.mxu0
      %v632 = vadd.f32 %v489, %v626
      %v633 = vadd.f32 %v492, %v629
      %v634 = vld [vmem:[%s2] sm:$0x1]
      %v636 = vlaneseq
      %v637 = vshrl.u32 %v636, 7
      %v638 = vsub.s32 0, %v637
      %v639 = vrot.slane %v634, %v638
      %v641 = vadd.f32 %v632, %v639
      %v642 = vadd.f32 %v633, %v639
      %p643 = scmp.eq.s32.totalorder %s17, 0
      // Predicated region
      $region33: #{resnet_encoder_forward.8} parent=31 // pred_check
        %p644 = pneg %p643
      $region34: #{resnet_encoder_forward.8} parent=31 // pred_check_branch
        %646 = sbr.rel (%p644) target = $region36
      $region35: #{resnet_encoder_forward.8} parent=31 // pred_region
        %647 = vst [vmem:[%s4] sm:$0x1] 0.0
        %648 = vst [vmem:[%s5] sm:$0x1] 0.0
      $region36: #{resnet_encoder_forward.8} parent=31 // pred_fallthru
        _
      %v649 = vld [vmem:[%s4] sm:$0x1]
      %v650 = vadd.f32 %v641, %v642
      %v651 = vrot.slane %v650, 4
      %v652 = vadd.f32 %v650, %v651
      %v653 = vrot.slane %v652, 2
      %v654 = vadd.f32 %v652, %v653
      %v655 = vrot.slane %v654, 1
      %v656 = vadd.f32 %v654, %v655
      %v657 = vadd.f32 %v649, %v656
      %658 = vst [vmem:[%s4] sm:$0x1] %v657
      %v659 = vld [vmem:[%s5] sm:$0x1]
      %v660 = vmul.f32 %v641, %v641
      %v661 = vmul.f32 %v642, %v642
      %v662 = vadd.f32 %v660, %v661
      %v663 = vrot.slane %v662, 4
      %v664 = vadd.f32 %v662, %v663
      %v665 = vrot.slane %v664, 2
      %v666 = vadd.f32 %v664, %v665
      %v667 = vrot.slane %v666, 1
      %v668 = vadd.f32 %v666, %v667
      %v669 = vadd.f32 %v659, %v668
      %670 = vst [vmem:[%s5] sm:$0x1] %v669
      %671 = vst [vmem:[%s219] sm:$0xff] %v641
      %672 = vst [vmem:[%s219 + $0x8] sm:$0xff] %v642
      %p673 = scmp.lt.s32.totalorder %s17, 1
      %s674 = scalar_select %p673, %s17, 1
      %s675 = smul.addr %s674, 2
      %s676 = smul.addr %s675, 8
      %s677 = scalar_lea.vmem %s3, %s676
      // Predicated region
      $region37: #{resnet_encoder_forward.8} parent=31 // pred_check
        %p678 = pneg %p103
      $region38: #{resnet_encoder_forward.8} parent=31 // pred_check_branch
        %680 = sbr.rel (%p678) target = $region40
      $region39: #{resnet_encoder_forward.8} parent=31 // pred_region
        _
      $region40: #{resnet_encoder_forward.8} parent=31 // pred_fallthru
        _
      // Predicated region
      $region41: #{resnet_encoder_forward.8} parent=31 // pred_check
        %p681 = pneg %p124
      $region42: #{resnet_encoder_forward.8} parent=31 // pred_check_branch
        %683 = sbr.rel (%p681) target = $region44
      $region43: #{resnet_encoder_forward.8} parent=31 // pred_region
        _
      $region44: #{resnet_encoder_forward.8} parent=31 // pred_fallthru
        _
      // Predicated region
      $region45: #{resnet_encoder_forward.8} parent=31 // pred_check
        %p684 = pneg %p145
      $region46: #{resnet_encoder_forward.8} parent=31 // pred_check_branch
        %686 = sbr.rel (%p684) target = $region48
      $region47: #{resnet_encoder_forward.8} parent=31 // pred_region
        _
      $region48: #{resnet_encoder_forward.8} parent=31 // pred_fallthru
        _
      // Predicated region
      $region49: #{resnet_encoder_forward.8} parent=31 // pred_check
        %p687 = pneg %p124
      $region50: #{resnet_encoder_forward.8} parent=31 // pred_check_branch
        %689 = sbr.rel (%p687) target = $region52
      $region51: #{resnet_encoder_forward.8} parent=31 // pred_region
        _
      $region52: #{resnet_encoder_forward.8} parent=31 // pred_fallthru
        _
      // Predicated region
      $region53: #{resnet_encoder_forward.8} parent=31 // pred_check
        %p690 = pneg %p145
      $region54: #{resnet_encoder_forward.8} parent=31 // pred_check_branch
        %692 = sbr.rel (%p690) target = $region56
      $region55: #{resnet_encoder_forward.8} parent=31 // pred_region
        _
      $region56: #{resnet_encoder_forward.8} parent=31 // pred_fallthru
        _
    $region32: #{resnet_encoder_forward.8} parent=5 // pred_fallthru
      _
    %p693 = scmp.le.s32.totalorder 2, %s12
    // Predicated region
    $region57: #{resnet_encoder_forward.8} parent=5 // pred_check
      %p694 = pneg %p693
    $region58: #{resnet_encoder_forward.8} parent=5 // pred_check_branch
      %696 = sbr.rel (%p694) target = $region60
    $region59: #{resnet_encoder_forward.8} parent=5 // pred_region
      %s697 = ssub.s32 %s12, 2
      // Predicated region
      $region61: #{resnet_encoder_forward.8} parent=59 // pred_check
        %p698 = pneg %p109
      $region62: #{resnet_encoder_forward.8} parent=59 // pred_check_branch
        %700 = sbr.rel (%p698) target = $region64
      $region63: #{resnet_encoder_forward.8} parent=59 // pred_region
        %p701 = scmp.lt.s32.totalorder %s18, 1
        %s702 = scalar_select %p701, %s18, 1
        %s703 = smul.addr %s702, 2
        %s704 = smul.addr %s703, 8
        %s705 = scalar_lea.vmem %s3, %s704
      $region64: #{resnet_encoder_forward.8} parent=59 // pred_fallthru
        _
    $region60: #{resnet_encoder_forward.8} parent=5 // pred_fallthru
      _
  $region6: #{resnet_encoder_forward.8} parent=0 // loop_footer
    %s16 = sadd.s32 1, %s12
  $region7: #{resnet_encoder_forward.8} parent=0 // loop_footer_branch
    %11 = sbr.rel target = $region3
  $region8: #{resnet_encoder_forward.8} parent=0 // loop_exit
    _

</llo_original>
